<compile_context>
chip_gen: v7x
topology: tpu7x:2x2x1
jax: 0.10.0
libtpu: 0.0.40
codegen_flags: <defaults>
</compile_context>

<pallas_src>
import jax
import jax.numpy as jnp
import numpy as np
from jax import lax
from jax.experimental import pallas as pl
from jax.experimental.pallas import tpu as pltpu


# --------------------- fused 2-layer LSTM + classifier kernel ---------------------
def make_fused_kernel(B, T, H, S, Dp):
    H4 = 4 * H

    def cell(gates, c_prev):
        """gates: (B, 4H) f32, PyTorch order i|f|g|o.  Whole-vreg activations
        (2 EUP pushes) + static lane slices; all math stays f32."""
        s = jax.nn.sigmoid(gates)
        th = jnp.tanh(gates)
        i = s[:, 0 * H:1 * H]
        f = s[:, 1 * H:2 * H]
        g = th[:, 2 * H:3 * H]
        o = s[:, 3 * H:4 * H]
        c = f * c_prev + i * g
        h = o * jnp.tanh(c)
        return h, c

    def kernel(x_ref, w1x_ref, wrec_ref, b_ref, wcb_ref, out_ref):
        # x_ref   : (T*B, Dp)  bf16, time-major (row = t*B + b)
        # w1x_ref : (Dp, 4H)   bf16   layer-1 input weights (rows >= Din are zero)
        # wrec_ref: (2H, 8H)   bf16   [[W1h, W2x], [0, W2h]]
        # b_ref   : (1, 8H)    f32    [b1_fused | b2_fused]
        # wcb_ref : (H+8, S)   f32    rows 0:H = classifier W^T, row H = bias
        b1 = b_ref[:, :H4]
        b2 = b_ref[:, H4:]

        # ---- Prologue: hoisted layer-1 input projection (off the serial path),
        #      fused bias folded in.  Held as a value (2 vregs), no scratch.
        gx = jnp.dot(x_ref[...], w1x_ref[...],
                     preferred_element_type=jnp.float32) + b1        # (T*B, 4H) f32

        wrec = wrec_ref[...]                                          # (2H, 8H) bf16

        z = jnp.zeros((B, H), jnp.float32)
        h1, c1, h2, c2 = z, z, z, z

        # ---- Skewed recurrence: ONE fused MXU matmul per iteration.
        #      At iteration t the carry holds h1_{t-1}, c1_{t-1}, h2_{t-2}, c2_{t-2}.
        for t in range(T):
            lhs = jnp.concatenate([h1, h2], axis=1).astype(jnp.bfloat16)   # (B, 2H)
            gg = jnp.dot(lhs, wrec, preferred_element_type=jnp.float32)    # (B, 8H)
            if t >= 1:
                # layer-2 cell at step t-1 (uses old h1/h2 via gg, old c2)
                h2, c2 = cell(gg[:, H4:] + b2, c2)
            # layer-1 cell at step t
            h1, c1 = cell(gx[t * B:(t + 1) * B, :] + gg[:, :H4], c1)

        # ---- Drain layer-2's final step (t = T-1).
        lhs = jnp.concatenate([h1, h2], axis=1).astype(jnp.bfloat16)
        g2 = jnp.dot(lhs, wrec[:, H4:], preferred_element_type=jnp.float32) + b2
        h2, c2 = cell(g2, c2)

        # ---- Epilogue: classifier on the final layer-2 hidden state (f32).
        wc = wcb_ref[:H, :]
        bc = wcb_ref[H:H + 1, :]
        out_ref[...] = jnp.dot(h2, wc, preferred_element_type=jnp.float32) + bc

    return kernel


# ----------------------------- Model wrapper -----------------------------
def rnn_model_forward(x_btd, params):
    """x_btd: (B, T, D) batch_first, same as the PyTorch module's forward."""
    B, T, Din = x_btd.shape
    assert len(params["lstm"]) == 2, "fused kernel is specialized for num_layers=2"
    l1, l2 = params["lstm"]
    H = l1["w_hh"].shape[1]
    S = params["cls"]["w"].shape[0]
    Dp = -(-Din // 64) * 64          # pad Din (40) to a lane-friendly 64

    # ---- Operand packing (layout plumbing only, done once per call) ----
    # time-major flattened slab (row = t*B + b), zero-padded, bf16
    x2d = jnp.transpose(x_btd, (1, 0, 2)).reshape(T * B, Din)
    x2d = jnp.pad(x2d, ((0, 0), (0, Dp - Din))).astype(jnp.bfloat16)

    w1x = (jnp.zeros((Dp, 4 * H), jnp.float32)
           .at[:Din].set(l1["w_ih"].T).astype(jnp.bfloat16))          # (Dp, 4H)

    b1 = (l1["b_ih"] + l1["b_hh"]).reshape(1, 4 * H)
    b2 = (l2["b_ih"] + l2["b_hh"]).reshape(1, 4 * H)
    bslab = jnp.concatenate([b1, b2], axis=1)                         # (1, 8H) f32

    w1h_t = l1["w_hh"].T                                              # (H, 4H)
    w2x_t = l2["w_ih"].T                                              # (H, 4H)
    w2h_t = l2["w_hh"].T                                              # (H, 4H)
    wrec = jnp.concatenate(
        [jnp.concatenate([w1h_t, w2x_t], axis=1),
         jnp.concatenate([jnp.zeros_like(w2h_t), w2h_t], axis=1)],
        axis=0).astype(jnp.bfloat16)                                  # (2H, 8H) bf16

    wcb = jnp.concatenate([params["cls"]["w"].T,
                           params["cls"]["b"].reshape(1, S),
                           jnp.zeros((7, S), jnp.float32)], axis=0)   # (H+8, S) f32

    kernel = pl.pallas_call(
        make_fused_kernel(B, T, H, S, Dp),
        out_shape=jax.ShapeDtypeStruct((B, S), jnp.float32),
        grid=(1,),
        in_specs=[
            pl.BlockSpec((T * B, Dp), lambda i: (0, 0)),      # x (time-major, bf16)
            pl.BlockSpec((Dp, 4 * H), lambda i: (0, 0)),      # W1x (bf16)
            pl.BlockSpec((2 * H, 8 * H), lambda i: (0, 0)),   # stacked recurrent W (bf16)
            pl.BlockSpec((1, 8 * H), lambda i: (0, 0)),       # fused biases (f32)
            pl.BlockSpec((H + 8, S), lambda i: (0, 0)),       # classifier W^T + bias (f32)
        ],
        out_specs=pl.BlockSpec((B, S), lambda i: (0, 0)),
        compiler_params=pltpu.CompilerParams(dimension_semantics=("arbitrary",)),
    )
    return kernel(x2d, w1x, wrec, bslab, wcb)


def init_params(key, num_speakers, input_dim, hidden_dim, num_layers):
    """PyTorch-shaped parameters (nn.LSTM / nn.Linear layout)."""
    k = 1.0 / np.sqrt(hidden_dim)
    layers = []
    for l in range(num_layers):
        din = input_dim if l == 0 else hidden_dim
        key, k1, k2, k3, k4 = jax.random.split(key, 5)
        layers.append({
            "w_ih": jax.random.uniform(k1, (4 * hidden_dim, din), jnp.float32, -k, k),
            "w_hh": jax.random.uniform(k2, (4 * hidden_dim, hidden_dim), jnp.float32, -k, k),
            "b_ih": jax.random.uniform(k3, (4 * hidden_dim,), jnp.float32, -k, k),
            "b_hh": jax.random.uniform(k4, (4 * hidden_dim,), jnp.float32, -k, k),
        })
    key, k5, k6 = jax.random.split(key, 3)
    cls = {"w": jax.random.uniform(k5, (num_speakers, hidden_dim), jnp.float32, -k, k),
           "b": jax.random.uniform(k6, (num_speakers,), jnp.float32, -k, k)}
    return {"lstm": layers, "cls": cls}


# ----------------------------- Pure-JAX reference -----------------------------
# Mirrors the kernel numerics: bf16 matmul operands, f32 accumulation,
# f32 gate nonlinearities / cell update, fused bias, PyTorch gate order.
def rnn_model_ref(x_btd, params):
    h = jnp.transpose(x_btd, (1, 0, 2)).astype(jnp.float32)   # (T, B, D)
    for layer in params["lstm"]:
        H = layer["w_hh"].shape[1]
        B = h.shape[1]
        w_ih_t = layer["w_ih"].T.astype(jnp.bfloat16)
        w_hh_t = layer["w_hh"].T.astype(jnp.bfloat16)
        b = (layer["b_ih"] + layer["b_hh"]).reshape(1, 4 * H)

        def step(carry, x_t, w_ih_t=w_ih_t, w_hh_t=w_hh_t, b=b, H=H):
            hp, cp = carry
            gates = (jnp.dot(x_t.astype(jnp.bfloat16), w_ih_t,
                             preferred_element_type=jnp.float32)
                     + jnp.dot(hp.astype(jnp.bfloat16), w_hh_t,
                               preferred_element_type=jnp.float32)
                     + b)
            i = jax.nn.sigmoid(gates[:, 0 * H:1 * H])
            f = jax.nn.sigmoid(gates[:, 1 * H:2 * H])
            g = jnp.tanh(gates[:, 2 * H:3 * H])
            o = jax.nn.sigmoid(gates[:, 3 * H:4 * H])
            c = f * cp + i * g
            hn = o * jnp.tanh(c)
            return (hn, c), hn

        init = (jnp.zeros((B, H), jnp.float32), jnp.zeros((B, H), jnp.float32))
        _, h = lax.scan(step, init, h)
    return h[-1] @ params["cls"]["w"].T + params["cls"]["b"]


if __name__ == "__main__":
    B, T = 2, 8
    NUM_SPEAKERS, INPUT_DIM, HIDDEN_DIM, NUM_LAYERS = 10, 40, 32, 2

    key = jax.random.PRNGKey(0)
    key, xkey = jax.random.split(key)
    x = jax.random.normal(xkey, (B, T, INPUT_DIM), jnp.float32)

    params = init_params(key, NUM_SPEAKERS, INPUT_DIM, HIDDEN_DIM, NUM_LAYERS)

    logits = jax.block_until_ready(rnn_model_forward(x, params))
    assert logits.shape == (B, NUM_SPEAKERS)

    ref = jax.block_until_ready(rnn_model_ref(x, params))
    np.testing.assert_allclose(np.asarray(logits), np.asarray(ref),
                               rtol=2e-3, atol=2e-3)
    print("KERNEL_OK")
</pallas_src>

<mosaic_0001>
module attributes {stable_mosaic.version = 11 : i64} {
  func.func @kernel(%arg0: i32, %arg1: memref<16x64xbf16, #tpu.memory_space<vmem>>, %arg2: memref<64x128xbf16, #tpu.memory_space<vmem>>, %arg3: memref<64x256xbf16, #tpu.memory_space<vmem>>, %arg4: memref<1x256xf32, #tpu.memory_space<vmem>>, %arg5: memref<40x10xf32, #tpu.memory_space<vmem>>, %arg6: memref<2x10xf32, #tpu.memory_space<vmem>>) attributes {dimension_semantics = [#tpu.dimension_semantics<arbitrary>], iteration_bounds = array<i64: 1>, scalar_prefetch = 0 : i64, scratch_operands = 0 : i64, tpu.core_type = #tpu.core_type<tc>, window_params = [{pipeline_mode = #tpu.pipeline_mode<synchronous>, transform_indices = @transform_0, window_bounds = array<i64: 16, 64>}, {pipeline_mode = #tpu.pipeline_mode<synchronous>, transform_indices = @transform_1, window_bounds = array<i64: 64, 128>}, {pipeline_mode = #tpu.pipeline_mode<synchronous>, transform_indices = @transform_2, window_bounds = array<i64: 64, 256>}, {pipeline_mode = #tpu.pipeline_mode<synchronous>, transform_indices = @transform_3, window_bounds = array<i64: 1, 256>}, {pipeline_mode = #tpu.pipeline_mode<synchronous>, transform_indices = @transform_4, window_bounds = array<i64: 40, 10>}, {pipeline_mode = #tpu.pipeline_mode<synchronous>, transform_indices = @transform_5, window_bounds = array<i64: 2, 10>}]} {
    %c0 = arith.constant 0 : index
    %c0_0 = arith.constant 0 : index
    %0 = vector.load %arg4[%c0, %c0_0] : memref<1x256xf32, #tpu.memory_space<vmem>>, vector<1x128xf32>
    %c0_1 = arith.constant 0 : index
    %c128 = arith.constant 128 : index
    %1 = vector.load %arg4[%c0_1, %c128] : memref<1x256xf32, #tpu.memory_space<vmem>>, vector<1x128xf32>
    %c0_2 = arith.constant 0 : index
    %c0_3 = arith.constant 0 : index
    %2 = vector.load %arg1[%c0_2, %c0_3] : memref<16x64xbf16, #tpu.memory_space<vmem>>, vector<16x64xbf16>
    %c0_4 = arith.constant 0 : index
    %c0_5 = arith.constant 0 : index
    %3 = vector.load %arg2[%c0_4, %c0_5] : memref<64x128xbf16, #tpu.memory_space<vmem>>, vector<64x128xbf16>
    %cst = arith.constant dense<0.000000e+00> : vector<16x128xf32>
    %4 = tpu.matmul %2, %3, %cst {dimension_numbers = #tpu.dot_dimension_numbers<[1], [0], [0], [1], [0, 0, 1, 1], [], []>} : vector<16x64xbf16>, vector<64x128xbf16>, vector<16x128xf32> -> vector<16x128xf32>
    %5 = vector.broadcast %0 : vector<1x128xf32> to vector<16x128xf32>
    %6 = arith.addf %4, %5 : vector<16x128xf32>
    %c0_6 = arith.constant 0 : index
    %c0_7 = arith.constant 0 : index
    %7 = vector.load %arg3[%c0_6, %c0_7] : memref<64x256xbf16, #tpu.memory_space<vmem>>, vector<64x256xbf16>
    %cst_8 = arith.constant 0.000000e+00 : f32
    %8 = vector.broadcast %cst_8 : f32 to vector<2x32xf32>
    %9 = tpu.concatenate %8, %8 in 1 : vector<2x32xf32>, vector<2x32xf32> -> vector<2x64xf32>
    %10 = arith.truncf %9 : vector<2x64xf32> to vector<2x64xbf16>
    %cst_9 = arith.constant dense<0.000000e+00> : vector<2x256xf32>
    %11 = tpu.matmul %10, %7, %cst_9 {dimension_numbers = #tpu.dot_dimension_numbers<[1], [0], [0], [1], [0, 0, 1, 1], [], []>} : vector<2x64xbf16>, vector<64x256xbf16>, vector<2x256xf32> -> vector<2x256xf32>
    %12 = vector.extract_strided_slice %6 {offsets = [0, 0], sizes = [2, 128], strides = [1, 1]} : vector<16x128xf32> to vector<2x128xf32>
    %13 = vector.extract_strided_slice %11 {offsets = [0, 0], sizes = [2, 128], strides = [1, 1]} : vector<2x256xf32> to vector<2x128xf32>
    %14 = arith.addf %12, %13 : vector<2x128xf32>
    %15 = arith.negf %14 : vector<2x128xf32>
    %16 = math.exp %15 : vector<2x128xf32>
    %cst_10 = arith.constant 1.000000e+00 : f32
    %17 = vector.broadcast %cst_10 : f32 to vector<2x128xf32>
    %18 = arith.addf %17, %16 : vector<2x128xf32>
    %19 = arith.divf %17, %18 : vector<2x128xf32>
    %20 = math.tanh %14 : vector<2x128xf32>
    %21 = vector.extract_strided_slice %19 {offsets = [0, 0], sizes = [2, 32], strides = [1, 1]} : vector<2x128xf32> to vector<2x32xf32>
    %22 = vector.extract_strided_slice %19 {offsets = [0, 32], sizes = [2, 32], strides = [1, 1]} : vector<2x128xf32> to vector<2x32xf32>
    %23 = vector.extract_strided_slice %20 {offsets = [0, 64], sizes = [2, 32], strides = [1, 1]} : vector<2x128xf32> to vector<2x32xf32>
    %24 = vector.extract_strided_slice %19 {offsets = [0, 96], sizes = [2, 32], strides = [1, 1]} : vector<2x128xf32> to vector<2x32xf32>
    %25 = arith.mulf %22, %8 : vector<2x32xf32>
    %26 = arith.mulf %21, %23 : vector<2x32xf32>
    %27 = arith.addf %25, %26 : vector<2x32xf32>
    %28 = math.tanh %27 : vector<2x32xf32>
    %29 = arith.mulf %24, %28 : vector<2x32xf32>
    %30 = tpu.concatenate %29, %8 in 1 : vector<2x32xf32>, vector<2x32xf32> -> vector<2x64xf32>
    %31 = arith.truncf %30 : vector<2x64xf32> to vector<2x64xbf16>
    %cst_11 = arith.constant dense<0.000000e+00> : vector<2x256xf32>
    %32 = tpu.matmul %31, %7, %cst_11 {dimension_numbers = #tpu.dot_dimension_numbers<[1], [0], [0], [1], [0, 0, 1, 1], [], []>} : vector<2x64xbf16>, vector<64x256xbf16>, vector<2x256xf32> -> vector<2x256xf32>
    %33 = vector.extract_strided_slice %32 {offsets = [0, 128], sizes = [2, 128], strides = [1, 1]} : vector<2x256xf32> to vector<2x128xf32>
    %34 = vector.broadcast %1 : vector<1x128xf32> to vector<2x128xf32>
    %35 = arith.addf %33, %34 : vector<2x128xf32>
    %36 = arith.negf %35 : vector<2x128xf32>
    %37 = math.exp %36 : vector<2x128xf32>
    %cst_12 = arith.constant 1.000000e+00 : f32
    %38 = vector.broadcast %cst_12 : f32 to vector<2x128xf32>
    %39 = arith.addf %38, %37 : vector<2x128xf32>
    %40 = arith.divf %38, %39 : vector<2x128xf32>
    %41 = math.tanh %35 : vector<2x128xf32>
    %42 = vector.extract_strided_slice %40 {offsets = [0, 0], sizes = [2, 32], strides = [1, 1]} : vector<2x128xf32> to vector<2x32xf32>
    %43 = vector.extract_strided_slice %40 {offsets = [0, 32], sizes = [2, 32], strides = [1, 1]} : vector<2x128xf32> to vector<2x32xf32>
    %44 = vector.extract_strided_slice %41 {offsets = [0, 64], sizes = [2, 32], strides = [1, 1]} : vector<2x128xf32> to vector<2x32xf32>
    %45 = vector.extract_strided_slice %40 {offsets = [0, 96], sizes = [2, 32], strides = [1, 1]} : vector<2x128xf32> to vector<2x32xf32>
    %46 = arith.mulf %43, %8 : vector<2x32xf32>
    %47 = arith.mulf %42, %44 : vector<2x32xf32>
    %48 = arith.addf %46, %47 : vector<2x32xf32>
    %49 = math.tanh %48 : vector<2x32xf32>
    %50 = arith.mulf %45, %49 : vector<2x32xf32>
    %51 = vector.extract_strided_slice %6 {offsets = [2, 0], sizes = [2, 128], strides = [1, 1]} : vector<16x128xf32> to vector<2x128xf32>
    %52 = vector.extract_strided_slice %32 {offsets = [0, 0], sizes = [2, 128], strides = [1, 1]} : vector<2x256xf32> to vector<2x128xf32>
    %53 = arith.addf %51, %52 : vector<2x128xf32>
    %54 = arith.negf %53 : vector<2x128xf32>
    %55 = math.exp %54 : vector<2x128xf32>
    %cst_13 = arith.constant 1.000000e+00 : f32
    %56 = vector.broadcast %cst_13 : f32 to vector<2x128xf32>
    %57 = arith.addf %56, %55 : vector<2x128xf32>
    %58 = arith.divf %56, %57 : vector<2x128xf32>
    %59 = math.tanh %53 : vector<2x128xf32>
    %60 = vector.extract_strided_slice %58 {offsets = [0, 0], sizes = [2, 32], strides = [1, 1]} : vector<2x128xf32> to vector<2x32xf32>
    %61 = vector.extract_strided_slice %58 {offsets = [0, 32], sizes = [2, 32], strides = [1, 1]} : vector<2x128xf32> to vector<2x32xf32>
    %62 = vector.extract_strided_slice %59 {offsets = [0, 64], sizes = [2, 32], strides = [1, 1]} : vector<2x128xf32> to vector<2x32xf32>
    %63 = vector.extract_strided_slice %58 {offsets = [0, 96], sizes = [2, 32], strides = [1, 1]} : vector<2x128xf32> to vector<2x32xf32>
    %64 = arith.mulf %61, %27 : vector<2x32xf32>
    %65 = arith.mulf %60, %62 : vector<2x32xf32>
    %66 = arith.addf %64, %65 : vector<2x32xf32>
    %67 = math.tanh %66 : vector<2x32xf32>
    %68 = arith.mulf %63, %67 : vector<2x32xf32>
    %69 = tpu.concatenate %68, %50 in 1 : vector<2x32xf32>, vector<2x32xf32> -> vector<2x64xf32>
    %70 = arith.truncf %69 : vector<2x64xf32> to vector<2x64xbf16>
    %cst_14 = arith.constant dense<0.000000e+00> : vector<2x256xf32>
    %71 = tpu.matmul %70, %7, %cst_14 {dimension_numbers = #tpu.dot_dimension_numbers<[1], [0], [0], [1], [0, 0, 1, 1], [], []>} : vector<2x64xbf16>, vector<64x256xbf16>, vector<2x256xf32> -> vector<2x256xf32>
    %72 = vector.extract_strided_slice %71 {offsets = [0, 128], sizes = [2, 128], strides = [1, 1]} : vector<2x256xf32> to vector<2x128xf32>
    %73 = vector.broadcast %1 : vector<1x128xf32> to vector<2x128xf32>
    %74 = arith.addf %72, %73 : vector<2x128xf32>
    %75 = arith.negf %74 : vector<2x128xf32>
    %76 = math.exp %75 : vector<2x128xf32>
    %cst_15 = arith.constant 1.000000e+00 : f32
    %77 = vector.broadcast %cst_15 : f32 to vector<2x128xf32>
    %78 = arith.addf %77, %76 : vector<2x128xf32>
    %79 = arith.divf %77, %78 : vector<2x128xf32>
    %80 = math.tanh %74 : vector<2x128xf32>
    %81 = vector.extract_strided_slice %79 {offsets = [0, 0], sizes = [2, 32], strides = [1, 1]} : vector<2x128xf32> to vector<2x32xf32>
    %82 = vector.extract_strided_slice %79 {offsets = [0, 32], sizes = [2, 32], strides = [1, 1]} : vector<2x128xf32> to vector<2x32xf32>
    %83 = vector.extract_strided_slice %80 {offsets = [0, 64], sizes = [2, 32], strides = [1, 1]} : vector<2x128xf32> to vector<2x32xf32>
    %84 = vector.extract_strided_slice %79 {offsets = [0, 96], sizes = [2, 32], strides = [1, 1]} : vector<2x128xf32> to vector<2x32xf32>
    %85 = arith.mulf %82, %48 : vector<2x32xf32>
    %86 = arith.mulf %81, %83 : vector<2x32xf32>
    %87 = arith.addf %85, %86 : vector<2x32xf32>
    %88 = math.tanh %87 : vector<2x32xf32>
    %89 = arith.mulf %84, %88 : vector<2x32xf32>
    %90 = vector.extract_strided_slice %6 {offsets = [4, 0], sizes = [2, 128], strides = [1, 1]} : vector<16x128xf32> to vector<2x128xf32>
    %91 = vector.extract_strided_slice %71 {offsets = [0, 0], sizes = [2, 128], strides = [1, 1]} : vector<2x256xf32> to vector<2x128xf32>
    %92 = arith.addf %90, %91 : vector<2x128xf32>
    %93 = arith.negf %92 : vector<2x128xf32>
    %94 = math.exp %93 : vector<2x128xf32>
    %cst_16 = arith.constant 1.000000e+00 : f32
    %95 = vector.broadcast %cst_16 : f32 to vector<2x128xf32>
    %96 = arith.addf %95, %94 : vector<2x128xf32>
    %97 = arith.divf %95, %96 : vector<2x128xf32>
    %98 = math.tanh %92 : vector<2x128xf32>
    %99 = vector.extract_strided_slice %97 {offsets = [0, 0], sizes = [2, 32], strides = [1, 1]} : vector<2x128xf32> to vector<2x32xf32>
    %100 = vector.extract_strided_slice %97 {offsets = [0, 32], sizes = [2, 32], strides = [1, 1]} : vector<2x128xf32> to vector<2x32xf32>
    %101 = vector.extract_strided_slice %98 {offsets = [0, 64], sizes = [2, 32], strides = [1, 1]} : vector<2x128xf32> to vector<2x32xf32>
    %102 = vector.extract_strided_slice %97 {offsets = [0, 96], sizes = [2, 32], strides = [1, 1]} : vector<2x128xf32> to vector<2x32xf32>
    %103 = arith.mulf %100, %66 : vector<2x32xf32>
    %104 = arith.mulf %99, %101 : vector<2x32xf32>
    %105 = arith.addf %103, %104 : vector<2x32xf32>
    %106 = math.tanh %105 : vector<2x32xf32>
    %107 = arith.mulf %102, %106 : vector<2x32xf32>
    %108 = tpu.concatenate %107, %89 in 1 : vector<2x32xf32>, vector<2x32xf32> -> vector<2x64xf32>
    %109 = arith.truncf %108 : vector<2x64xf32> to vector<2x64xbf16>
    %cst_17 = arith.constant dense<0.000000e+00> : vector<2x256xf32>
    %110 = tpu.matmul %109, %7, %cst_17 {dimension_numbers = #tpu.dot_dimension_numbers<[1], [0], [0], [1], [0, 0, 1, 1], [], []>} : vector<2x64xbf16>, vector<64x256xbf16>, vector<2x256xf32> -> vector<2x256xf32>
    %111 = vector.extract_strided_slice %110 {offsets = [0, 128], sizes = [2, 128], strides = [1, 1]} : vector<2x256xf32> to vector<2x128xf32>
    %112 = vector.broadcast %1 : vector<1x128xf32> to vector<2x128xf32>
    %113 = arith.addf %111, %112 : vector<2x128xf32>
    %114 = arith.negf %113 : vector<2x128xf32>
    %115 = math.exp %114 : vector<2x128xf32>
    %cst_18 = arith.constant 1.000000e+00 : f32
    %116 = vector.broadcast %cst_18 : f32 to vector<2x128xf32>
    %117 = arith.addf %116, %115 : vector<2x128xf32>
    %118 = arith.divf %116, %117 : vector<2x128xf32>
    %119 = math.tanh %113 : vector<2x128xf32>
    %120 = vector.extract_strided_slice %118 {offsets = [0, 0], sizes = [2, 32], strides = [1, 1]} : vector<2x128xf32> to vector<2x32xf32>
    %121 = vector.extract_strided_slice %118 {offsets = [0, 32], sizes = [2, 32], strides = [1, 1]} : vector<2x128xf32> to vector<2x32xf32>
    %122 = vector.extract_strided_slice %119 {offsets = [0, 64], sizes = [2, 32], strides = [1, 1]} : vector<2x128xf32> to vector<2x32xf32>
    %123 = vector.extract_strided_slice %118 {offsets = [0, 96], sizes = [2, 32], strides = [1, 1]} : vector<2x128xf32> to vector<2x32xf32>
    %124 = arith.mulf %121, %87 : vector<2x32xf32>
    %125 = arith.mulf %120, %122 : vector<2x32xf32>
    %126 = arith.addf %124, %125 : vector<2x32xf32>
    %127 = math.tanh %126 : vector<2x32xf32>
    %128 = arith.mulf %123, %127 : vector<2x32xf32>
    %129 = vector.extract_strided_slice %6 {offsets = [6, 0], sizes = [2, 128], strides = [1, 1]} : vector<16x128xf32> to vector<2x128xf32>
    %130 = vector.extract_strided_slice %110 {offsets = [0, 0], sizes = [2, 128], strides = [1, 1]} : vector<2x256xf32> to vector<2x128xf32>
    %131 = arith.addf %129, %130 : vector<2x128xf32>
    %132 = arith.negf %131 : vector<2x128xf32>
    %133 = math.exp %132 : vector<2x128xf32>
    %cst_19 = arith.constant 1.000000e+00 : f32
    %134 = vector.broadcast %cst_19 : f32 to vector<2x128xf32>
    %135 = arith.addf %134, %133 : vector<2x128xf32>
    %136 = arith.divf %134, %135 : vector<2x128xf32>
    %137 = math.tanh %131 : vector<2x128xf32>
    %138 = vector.extract_strided_slice %136 {offsets = [0, 0], sizes = [2, 32], strides = [1, 1]} : vector<2x128xf32> to vector<2x32xf32>
    %139 = vector.extract_strided_slice %136 {offsets = [0, 32], sizes = [2, 32], strides = [1, 1]} : vector<2x128xf32> to vector<2x32xf32>
    %140 = vector.extract_strided_slice %137 {offsets = [0, 64], sizes = [2, 32], strides = [1, 1]} : vector<2x128xf32> to vector<2x32xf32>
    %141 = vector.extract_strided_slice %136 {offsets = [0, 96], sizes = [2, 32], strides = [1, 1]} : vector<2x128xf32> to vector<2x32xf32>
    %142 = arith.mulf %139, %105 : vector<2x32xf32>
    %143 = arith.mulf %138, %140 : vector<2x32xf32>
    %144 = arith.addf %142, %143 : vector<2x32xf32>
    %145 = math.tanh %144 : vector<2x32xf32>
    %146 = arith.mulf %141, %145 : vector<2x32xf32>
    %147 = tpu.concatenate %146, %128 in 1 : vector<2x32xf32>, vector<2x32xf32> -> vector<2x64xf32>
    %148 = arith.truncf %147 : vector<2x64xf32> to vector<2x64xbf16>
    %cst_20 = arith.constant dense<0.000000e+00> : vector<2x256xf32>
    %149 = tpu.matmul %148, %7, %cst_20 {dimension_numbers = #tpu.dot_dimension_numbers<[1], [0], [0], [1], [0, 0, 1, 1], [], []>} : vector<2x64xbf16>, vector<64x256xbf16>, vector<2x256xf32> -> vector<2x256xf32>
    %150 = vector.extract_strided_slice %149 {offsets = [0, 128], sizes = [2, 128], strides = [1, 1]} : vector<2x256xf32> to vector<2x128xf32>
    %151 = vector.broadcast %1 : vector<1x128xf32> to vector<2x128xf32>
    %152 = arith.addf %150, %151 : vector<2x128xf32>
    %153 = arith.negf %152 : vector<2x128xf32>
    %154 = math.exp %153 : vector<2x128xf32>
    %cst_21 = arith.constant 1.000000e+00 : f32
    %155 = vector.broadcast %cst_21 : f32 to vector<2x128xf32>
    %156 = arith.addf %155, %154 : vector<2x128xf32>
    %157 = arith.divf %155, %156 : vector<2x128xf32>
    %158 = math.tanh %152 : vector<2x128xf32>
    %159 = vector.extract_strided_slice %157 {offsets = [0, 0], sizes = [2, 32], strides = [1, 1]} : vector<2x128xf32> to vector<2x32xf32>
    %160 = vector.extract_strided_slice %157 {offsets = [0, 32], sizes = [2, 32], strides = [1, 1]} : vector<2x128xf32> to vector<2x32xf32>
    %161 = vector.extract_strided_slice %158 {offsets = [0, 64], sizes = [2, 32], strides = [1, 1]} : vector<2x128xf32> to vector<2x32xf32>
    %162 = vector.extract_strided_slice %157 {offsets = [0, 96], sizes = [2, 32], strides = [1, 1]} : vector<2x128xf32> to vector<2x32xf32>
    %163 = arith.mulf %160, %126 : vector<2x32xf32>
    %164 = arith.mulf %159, %161 : vector<2x32xf32>
    %165 = arith.addf %163, %164 : vector<2x32xf32>
    %166 = math.tanh %165 : vector<2x32xf32>
    %167 = arith.mulf %162, %166 : vector<2x32xf32>
    %168 = vector.extract_strided_slice %6 {offsets = [8, 0], sizes = [2, 128], strides = [1, 1]} : vector<16x128xf32> to vector<2x128xf32>
    %169 = vector.extract_strided_slice %149 {offsets = [0, 0], sizes = [2, 128], strides = [1, 1]} : vector<2x256xf32> to vector<2x128xf32>
    %170 = arith.addf %168, %169 : vector<2x128xf32>
    %171 = arith.negf %170 : vector<2x128xf32>
    %172 = math.exp %171 : vector<2x128xf32>
    %cst_22 = arith.constant 1.000000e+00 : f32
    %173 = vector.broadcast %cst_22 : f32 to vector<2x128xf32>
    %174 = arith.addf %173, %172 : vector<2x128xf32>
    %175 = arith.divf %173, %174 : vector<2x128xf32>
    %176 = math.tanh %170 : vector<2x128xf32>
    %177 = vector.extract_strided_slice %175 {offsets = [0, 0], sizes = [2, 32], strides = [1, 1]} : vector<2x128xf32> to vector<2x32xf32>
    %178 = vector.extract_strided_slice %175 {offsets = [0, 32], sizes = [2, 32], strides = [1, 1]} : vector<2x128xf32> to vector<2x32xf32>
    %179 = vector.extract_strided_slice %176 {offsets = [0, 64], sizes = [2, 32], strides = [1, 1]} : vector<2x128xf32> to vector<2x32xf32>
    %180 = vector.extract_strided_slice %175 {offsets = [0, 96], sizes = [2, 32], strides = [1, 1]} : vector<2x128xf32> to vector<2x32xf32>
    %181 = arith.mulf %178, %144 : vector<2x32xf32>
    %182 = arith.mulf %177, %179 : vector<2x32xf32>
    %183 = arith.addf %181, %182 : vector<2x32xf32>
    %184 = math.tanh %183 : vector<2x32xf32>
    %185 = arith.mulf %180, %184 : vector<2x32xf32>
    %186 = tpu.concatenate %185, %167 in 1 : vector<2x32xf32>, vector<2x32xf32> -> vector<2x64xf32>
    %187 = arith.truncf %186 : vector<2x64xf32> to vector<2x64xbf16>
    %cst_23 = arith.constant dense<0.000000e+00> : vector<2x256xf32>
    %188 = tpu.matmul %187, %7, %cst_23 {dimension_numbers = #tpu.dot_dimension_numbers<[1], [0], [0], [1], [0, 0, 1, 1], [], []>} : vector<2x64xbf16>, vector<64x256xbf16>, vector<2x256xf32> -> vector<2x256xf32>
    %189 = vector.extract_strided_slice %188 {offsets = [0, 128], sizes = [2, 128], strides = [1, 1]} : vector<2x256xf32> to vector<2x128xf32>
    %190 = vector.broadcast %1 : vector<1x128xf32> to vector<2x128xf32>
    %191 = arith.addf %189, %190 : vector<2x128xf32>
    %192 = arith.negf %191 : vector<2x128xf32>
    %193 = math.exp %192 : vector<2x128xf32>
    %cst_24 = arith.constant 1.000000e+00 : f32
    %194 = vector.broadcast %cst_24 : f32 to vector<2x128xf32>
    %195 = arith.addf %194, %193 : vector<2x128xf32>
    %196 = arith.divf %194, %195 : vector<2x128xf32>
    %197 = math.tanh %191 : vector<2x128xf32>
    %198 = vector.extract_strided_slice %196 {offsets = [0, 0], sizes = [2, 32], strides = [1, 1]} : vector<2x128xf32> to vector<2x32xf32>
    %199 = vector.extract_strided_slice %196 {offsets = [0, 32], sizes = [2, 32], strides = [1, 1]} : vector<2x128xf32> to vector<2x32xf32>
    %200 = vector.extract_strided_slice %197 {offsets = [0, 64], sizes = [2, 32], strides = [1, 1]} : vector<2x128xf32> to vector<2x32xf32>
    %201 = vector.extract_strided_slice %196 {offsets = [0, 96], sizes = [2, 32], strides = [1, 1]} : vector<2x128xf32> to vector<2x32xf32>
    %202 = arith.mulf %199, %165 : vector<2x32xf32>
    %203 = arith.mulf %198, %200 : vector<2x32xf32>
    %204 = arith.addf %202, %203 : vector<2x32xf32>
    %205 = math.tanh %204 : vector<2x32xf32>
    %206 = arith.mulf %201, %205 : vector<2x32xf32>
    %207 = vector.extract_strided_slice %6 {offsets = [10, 0], sizes = [2, 128], strides = [1, 1]} : vector<16x128xf32> to vector<2x128xf32>
    %208 = vector.extract_strided_slice %188 {offsets = [0, 0], sizes = [2, 128], strides = [1, 1]} : vector<2x256xf32> to vector<2x128xf32>
    %209 = arith.addf %207, %208 : vector<2x128xf32>
    %210 = arith.negf %209 : vector<2x128xf32>
    %211 = math.exp %210 : vector<2x128xf32>
    %cst_25 = arith.constant 1.000000e+00 : f32
    %212 = vector.broadcast %cst_25 : f32 to vector<2x128xf32>
    %213 = arith.addf %212, %211 : vector<2x128xf32>
    %214 = arith.divf %212, %213 : vector<2x128xf32>
    %215 = math.tanh %209 : vector<2x128xf32>
    %216 = vector.extract_strided_slice %214 {offsets = [0, 0], sizes = [2, 32], strides = [1, 1]} : vector<2x128xf32> to vector<2x32xf32>
    %217 = vector.extract_strided_slice %214 {offsets = [0, 32], sizes = [2, 32], strides = [1, 1]} : vector<2x128xf32> to vector<2x32xf32>
    %218 = vector.extract_strided_slice %215 {offsets = [0, 64], sizes = [2, 32], strides = [1, 1]} : vector<2x128xf32> to vector<2x32xf32>
    %219 = vector.extract_strided_slice %214 {offsets = [0, 96], sizes = [2, 32], strides = [1, 1]} : vector<2x128xf32> to vector<2x32xf32>
    %220 = arith.mulf %217, %183 : vector<2x32xf32>
    %221 = arith.mulf %216, %218 : vector<2x32xf32>
    %222 = arith.addf %220, %221 : vector<2x32xf32>
    %223 = math.tanh %222 : vector<2x32xf32>
    %224 = arith.mulf %219, %223 : vector<2x32xf32>
    %225 = tpu.concatenate %224, %206 in 1 : vector<2x32xf32>, vector<2x32xf32> -> vector<2x64xf32>
    %226 = arith.truncf %225 : vector<2x64xf32> to vector<2x64xbf16>
    %cst_26 = arith.constant dense<0.000000e+00> : vector<2x256xf32>
    %227 = tpu.matmul %226, %7, %cst_26 {dimension_numbers = #tpu.dot_dimension_numbers<[1], [0], [0], [1], [0, 0, 1, 1], [], []>} : vector<2x64xbf16>, vector<64x256xbf16>, vector<2x256xf32> -> vector<2x256xf32>
    %228 = vector.extract_strided_slice %227 {offsets = [0, 128], sizes = [2, 128], strides = [1, 1]} : vector<2x256xf32> to vector<2x128xf32>
    %229 = vector.broadcast %1 : vector<1x128xf32> to vector<2x128xf32>
    %230 = arith.addf %228, %229 : vector<2x128xf32>
    %231 = arith.negf %230 : vector<2x128xf32>
    %232 = math.exp %231 : vector<2x128xf32>
    %cst_27 = arith.constant 1.000000e+00 : f32
    %233 = vector.broadcast %cst_27 : f32 to vector<2x128xf32>
    %234 = arith.addf %233, %232 : vector<2x128xf32>
    %235 = arith.divf %233, %234 : vector<2x128xf32>
    %236 = math.tanh %230 : vector<2x128xf32>
    %237 = vector.extract_strided_slice %235 {offsets = [0, 0], sizes = [2, 32], strides = [1, 1]} : vector<2x128xf32> to vector<2x32xf32>
    %238 = vector.extract_strided_slice %235 {offsets = [0, 32], sizes = [2, 32], strides = [1, 1]} : vector<2x128xf32> to vector<2x32xf32>
    %239 = vector.extract_strided_slice %236 {offsets = [0, 64], sizes = [2, 32], strides = [1, 1]} : vector<2x128xf32> to vector<2x32xf32>
    %240 = vector.extract_strided_slice %235 {offsets = [0, 96], sizes = [2, 32], strides = [1, 1]} : vector<2x128xf32> to vector<2x32xf32>
    %241 = arith.mulf %238, %204 : vector<2x32xf32>
    %242 = arith.mulf %237, %239 : vector<2x32xf32>
    %243 = arith.addf %241, %242 : vector<2x32xf32>
    %244 = math.tanh %243 : vector<2x32xf32>
    %245 = arith.mulf %240, %244 : vector<2x32xf32>
    %246 = vector.extract_strided_slice %6 {offsets = [12, 0], sizes = [2, 128], strides = [1, 1]} : vector<16x128xf32> to vector<2x128xf32>
    %247 = vector.extract_strided_slice %227 {offsets = [0, 0], sizes = [2, 128], strides = [1, 1]} : vector<2x256xf32> to vector<2x128xf32>
    %248 = arith.addf %246, %247 : vector<2x128xf32>
    %249 = arith.negf %248 : vector<2x128xf32>
    %250 = math.exp %249 : vector<2x128xf32>
    %cst_28 = arith.constant 1.000000e+00 : f32
    %251 = vector.broadcast %cst_28 : f32 to vector<2x128xf32>
    %252 = arith.addf %251, %250 : vector<2x128xf32>
    %253 = arith.divf %251, %252 : vector<2x128xf32>
    %254 = math.tanh %248 : vector<2x128xf32>
    %255 = vector.extract_strided_slice %253 {offsets = [0, 0], sizes = [2, 32], strides = [1, 1]} : vector<2x128xf32> to vector<2x32xf32>
    %256 = vector.extract_strided_slice %253 {offsets = [0, 32], sizes = [2, 32], strides = [1, 1]} : vector<2x128xf32> to vector<2x32xf32>
    %257 = vector.extract_strided_slice %254 {offsets = [0, 64], sizes = [2, 32], strides = [1, 1]} : vector<2x128xf32> to vector<2x32xf32>
    %258 = vector.extract_strided_slice %253 {offsets = [0, 96], sizes = [2, 32], strides = [1, 1]} : vector<2x128xf32> to vector<2x32xf32>
    %259 = arith.mulf %256, %222 : vector<2x32xf32>
    %260 = arith.mulf %255, %257 : vector<2x32xf32>
    %261 = arith.addf %259, %260 : vector<2x32xf32>
    %262 = math.tanh %261 : vector<2x32xf32>
    %263 = arith.mulf %258, %262 : vector<2x32xf32>
    %264 = tpu.concatenate %263, %245 in 1 : vector<2x32xf32>, vector<2x32xf32> -> vector<2x64xf32>
    %265 = arith.truncf %264 : vector<2x64xf32> to vector<2x64xbf16>
    %cst_29 = arith.constant dense<0.000000e+00> : vector<2x256xf32>
    %266 = tpu.matmul %265, %7, %cst_29 {dimension_numbers = #tpu.dot_dimension_numbers<[1], [0], [0], [1], [0, 0, 1, 1], [], []>} : vector<2x64xbf16>, vector<64x256xbf16>, vector<2x256xf32> -> vector<2x256xf32>
    %267 = vector.extract_strided_slice %266 {offsets = [0, 128], sizes = [2, 128], strides = [1, 1]} : vector<2x256xf32> to vector<2x128xf32>
    %268 = vector.broadcast %1 : vector<1x128xf32> to vector<2x128xf32>
    %269 = arith.addf %267, %268 : vector<2x128xf32>
    %270 = arith.negf %269 : vector<2x128xf32>
    %271 = math.exp %270 : vector<2x128xf32>
    %cst_30 = arith.constant 1.000000e+00 : f32
    %272 = vector.broadcast %cst_30 : f32 to vector<2x128xf32>
    %273 = arith.addf %272, %271 : vector<2x128xf32>
    %274 = arith.divf %272, %273 : vector<2x128xf32>
    %275 = math.tanh %269 : vector<2x128xf32>
    %276 = vector.extract_strided_slice %274 {offsets = [0, 0], sizes = [2, 32], strides = [1, 1]} : vector<2x128xf32> to vector<2x32xf32>
    %277 = vector.extract_strided_slice %274 {offsets = [0, 32], sizes = [2, 32], strides = [1, 1]} : vector<2x128xf32> to vector<2x32xf32>
    %278 = vector.extract_strided_slice %275 {offsets = [0, 64], sizes = [2, 32], strides = [1, 1]} : vector<2x128xf32> to vector<2x32xf32>
    %279 = vector.extract_strided_slice %274 {offsets = [0, 96], sizes = [2, 32], strides = [1, 1]} : vector<2x128xf32> to vector<2x32xf32>
    %280 = arith.mulf %277, %243 : vector<2x32xf32>
    %281 = arith.mulf %276, %278 : vector<2x32xf32>
    %282 = arith.addf %280, %281 : vector<2x32xf32>
    %283 = math.tanh %282 : vector<2x32xf32>
    %284 = arith.mulf %279, %283 : vector<2x32xf32>
    %285 = vector.extract_strided_slice %6 {offsets = [14, 0], sizes = [2, 128], strides = [1, 1]} : vector<16x128xf32> to vector<2x128xf32>
    %286 = vector.extract_strided_slice %266 {offsets = [0, 0], sizes = [2, 128], strides = [1, 1]} : vector<2x256xf32> to vector<2x128xf32>
    %287 = arith.addf %285, %286 : vector<2x128xf32>
    %288 = arith.negf %287 : vector<2x128xf32>
    %289 = math.exp %288 : vector<2x128xf32>
    %cst_31 = arith.constant 1.000000e+00 : f32
    %290 = vector.broadcast %cst_31 : f32 to vector<2x128xf32>
    %291 = arith.addf %290, %289 : vector<2x128xf32>
    %292 = arith.divf %290, %291 : vector<2x128xf32>
    %293 = math.tanh %287 : vector<2x128xf32>
    %294 = vector.extract_strided_slice %292 {offsets = [0, 0], sizes = [2, 32], strides = [1, 1]} : vector<2x128xf32> to vector<2x32xf32>
    %295 = vector.extract_strided_slice %292 {offsets = [0, 32], sizes = [2, 32], strides = [1, 1]} : vector<2x128xf32> to vector<2x32xf32>
    %296 = vector.extract_strided_slice %293 {offsets = [0, 64], sizes = [2, 32], strides = [1, 1]} : vector<2x128xf32> to vector<2x32xf32>
    %297 = vector.extract_strided_slice %292 {offsets = [0, 96], sizes = [2, 32], strides = [1, 1]} : vector<2x128xf32> to vector<2x32xf32>
    %298 = arith.mulf %295, %261 : vector<2x32xf32>
    %299 = arith.mulf %294, %296 : vector<2x32xf32>
    %300 = arith.addf %298, %299 : vector<2x32xf32>
    %301 = math.tanh %300 : vector<2x32xf32>
    %302 = arith.mulf %297, %301 : vector<2x32xf32>
    %303 = tpu.concatenate %302, %284 in 1 : vector<2x32xf32>, vector<2x32xf32> -> vector<2x64xf32>
    %304 = arith.truncf %303 : vector<2x64xf32> to vector<2x64xbf16>
    %305 = vector.extract_strided_slice %7 {offsets = [0, 128], sizes = [64, 128], strides = [1, 1]} : vector<64x256xbf16> to vector<64x128xbf16>
    %cst_32 = arith.constant dense<0.000000e+00> : vector<2x128xf32>
    %306 = tpu.matmul %304, %305, %cst_32 {dimension_numbers = #tpu.dot_dimension_numbers<[1], [0], [0], [1], [0, 0, 1, 1], [], []>} : vector<2x64xbf16>, vector<64x128xbf16>, vector<2x128xf32> -> vector<2x128xf32>
    %307 = vector.broadcast %1 : vector<1x128xf32> to vector<2x128xf32>
    %308 = arith.addf %306, %307 : vector<2x128xf32>
    %309 = arith.negf %308 : vector<2x128xf32>
    %310 = math.exp %309 : vector<2x128xf32>
    %cst_33 = arith.constant 1.000000e+00 : f32
    %311 = vector.broadcast %cst_33 : f32 to vector<2x128xf32>
    %312 = arith.addf %311, %310 : vector<2x128xf32>
    %313 = arith.divf %311, %312 : vector<2x128xf32>
    %314 = math.tanh %308 : vector<2x128xf32>
    %315 = vector.extract_strided_slice %313 {offsets = [0, 0], sizes = [2, 32], strides = [1, 1]} : vector<2x128xf32> to vector<2x32xf32>
    %316 = vector.extract_strided_slice %313 {offsets = [0, 32], sizes = [2, 32], strides = [1, 1]} : vector<2x128xf32> to vector<2x32xf32>
    %317 = vector.extract_strided_slice %314 {offsets = [0, 64], sizes = [2, 32], strides = [1, 1]} : vector<2x128xf32> to vector<2x32xf32>
    %318 = vector.extract_strided_slice %313 {offsets = [0, 96], sizes = [2, 32], strides = [1, 1]} : vector<2x128xf32> to vector<2x32xf32>
    %319 = arith.mulf %316, %282 : vector<2x32xf32>
    %320 = arith.mulf %315, %317 : vector<2x32xf32>
    %321 = arith.addf %319, %320 : vector<2x32xf32>
    %322 = math.tanh %321 : vector<2x32xf32>
    %323 = arith.mulf %318, %322 : vector<2x32xf32>
    %c0_34 = arith.constant 0 : index
    %c0_35 = arith.constant 0 : index
    %324 = vector.load %arg5[%c0_34, %c0_35] : memref<40x10xf32, #tpu.memory_space<vmem>>, vector<32x10xf32>
    %c32 = arith.constant 32 : index
    %c0_36 = arith.constant 0 : index
    %325 = vector.load %arg5[%c32, %c0_36] : memref<40x10xf32, #tpu.memory_space<vmem>>, vector<1x10xf32>
    %cst_37 = arith.constant dense<0.000000e+00> : vector<2x10xf32>
    %326 = tpu.matmul %323, %324, %cst_37 {dimension_numbers = #tpu.dot_dimension_numbers<[1], [0], [0], [1], [0, 0, 1, 1], [], []>} : vector<2x32xf32>, vector<32x10xf32>, vector<2x10xf32> -> vector<2x10xf32>
    %327 = vector.broadcast %325 : vector<1x10xf32> to vector<2x10xf32>
    %328 = arith.addf %326, %327 : vector<2x10xf32>
    %c0_38 = arith.constant 0 : index
    %c0_39 = arith.constant 0 : index
    %329 = vector.load %arg6[%c0_38, %c0_39] : memref<2x10xf32, #tpu.memory_space<vmem>>, vector<2x10xf32>
    tpu.vector_store %arg6[%c0_38, %c0_39], %328 {strides = array<i32>} : memref<2x10xf32, #tpu.memory_space<vmem>>, vector<2x10xf32>,
    return
  }
  func.func @transform_0(%arg0: i32) -> (i32, i32) {
    %c0_i32 = arith.constant 0 : i32
    %c0_i32_0 = arith.constant 0 : i32
    %c0_i32_1 = arith.constant 0 : i32
    return %c0_i32, %c0_i32_0 : i32, i32
  }
  func.func @transform_1(%arg0: i32) -> (i32, i32) {
    %c0_i32 = arith.constant 0 : i32
    %c0_i32_0 = arith.constant 0 : i32
    %c0_i32_1 = arith.constant 0 : i32
    return %c0_i32, %c0_i32_0 : i32, i32
  }
  func.func @transform_2(%arg0: i32) -> (i32, i32) {
    %c0_i32 = arith.constant 0 : i32
    %c0_i32_0 = arith.constant 0 : i32
    %c0_i32_1 = arith.constant 0 : i32
    return %c0_i32, %c0_i32_0 : i32, i32
  }
  func.func @transform_3(%arg0: i32) -> (i32, i32) {
    %c0_i32 = arith.constant 0 : i32
    %c0_i32_0 = arith.constant 0 : i32
    %c0_i32_1 = arith.constant 0 : i32
    return %c0_i32, %c0_i32_0 : i32, i32
  }
  func.func @transform_4(%arg0: i32) -> (i32, i32) {
    %c0_i32 = arith.constant 0 : i32
    %c0_i32_0 = arith.constant 0 : i32
    %c0_i32_1 = arith.constant 0 : i32
    return %c0_i32, %c0_i32_0 : i32, i32
  }
  func.func @transform_5(%arg0: i32) -> (i32, i32) {
    %c0_i32 = arith.constant 0 : i32
    %c0_i32_0 = arith.constant 0 : i32
    %c0_i32_1 = arith.constant 0 : i32
    return %c0_i32, %c0_i32_0 : i32, i32
  }
}

</mosaic_0001>

<llo_original>
// kernel: tpu_custom_call.1
$region0: #{tpu_custom_call.1}
  #allocation0 [shape = 'u32[]', space=smem, size = 0x4, offset = 0x4, fixed_abs, tag = 'smem constant byte address 0x4 - core index']
  #allocation1 [shape = 'u32[144,128]{1,0:T(1,128)}', space=vmem, size = 0x12000, scoped, tag = 'internal scratch']
  %s0 = inlined_call_operand.vmem [shape: bf16[16,64], index: 0, kind: input, shape index: {}]
  %s1 = inlined_call_operand.vmem [shape: bf16[64,128], index: 1, kind: input, shape index: {}]
  %s2 = inlined_call_operand.hbm [shape: bf16[64,256], index: 2, kind: input, shape index: {}]
  %s3 = inlined_call_operand.vmem [shape: f32[1,256], index: 3, kind: input, shape index: {}]
  %s4 = inlined_call_operand.vmem [shape: f32[40,10], index: 4, kind: input, shape index: {}]
  %s5 = inlined_call_operand.hbm [shape: f32[2,10], index: 5, kind: output, shape index: {}]
  %s6 = sld [smem:[#allocation0]]
  $region34: #{tpu_custom_call.1} parent=0
    _
  %s8 = ssub.s32 1, %s6
  %s9 = scalar_select 0, %s8, %s6
  $region1: #{tpu_custom_call.1} parent=0
    #allocation2 [shape = 'u8[32768]{0}', space=vmem, size = 0x8000, scoped, tag = 'input window, operand 2, single buffered']
    #allocation3 [shape = 's32[1]{0}', space=sflag, size = 0x4, scoped, tag = 'scoped memory for tpu_custom_call.1']
    #allocation4 [shape = 's32[1]{0}', space=sflag, size = 0x4, scoped, tag = 'scoped memory for tpu_custom_call.1']
    #allocation5 [shape = 'u8[1024]{0}', space=vmem, size = 0x400, scoped, tag = 'output window, operand 0, single buffered']
    %10 = vsyncpa [#allocation3], 0
    %11 = vsyncpa [#allocation4], 0
    // Predicated region
    $region2: #{tpu_custom_call.1} parent=1 // pred_check
      _
    $region3: #{tpu_custom_call.1} parent=1 // pred_check_branch
      %13 = sbr.rel (0) target = $region5
    $region4: #{tpu_custom_call.1} parent=1 // pred_region
      _
    $region5: #{tpu_custom_call.1} parent=1 // pred_fallthru
      _
    // Predicated region
    $region6: #{tpu_custom_call.1} parent=1 // pred_check
      _
    $region7: #{tpu_custom_call.1} parent=1 // pred_check_branch
      %15 = sbr.rel (0) target = $region9
    $region8: #{tpu_custom_call.1} parent=1 // pred_region
      _
    $region9: #{tpu_custom_call.1} parent=1 // pred_fallthru
      _
    // Predicated region
    $region10: #{tpu_custom_call.1} parent=1 // pred_check
      _
    $region11: #{tpu_custom_call.1} parent=1 // pred_check_branch
      %17 = sbr.rel (0) target = $region13
    $region12: #{tpu_custom_call.1} parent=1 // pred_region
      %s19 = ssub.s32 1024, 1024
      %20 = vsyncadd [#allocation3], %s19
      %s21 = sshll.u32 [#allocation2], 4
      %s22 = int_to_ptr.vmem [resolvable:$true] %s21
      %27 = dma.hbm_to_vmem [thread:$0]  %s2, 1024, %s22, [#allocation3], 128, 128, 8
    $region13: #{tpu_custom_call.1} parent=1 // pred_fallthru
      _
    // Predicated region
    $region14: #{tpu_custom_call.1} parent=1 // pred_check
      _
    $region15: #{tpu_custom_call.1} parent=1 // pred_check_branch
      %29 = sbr.rel (0) target = $region17
    $region16: #{tpu_custom_call.1} parent=1 // pred_region
      _
    $region17: #{tpu_custom_call.1} parent=1 // pred_fallthru
      _
    // Predicated region
    $region18: #{tpu_custom_call.1} parent=1 // pred_check
      _
    $region19: #{tpu_custom_call.1} parent=1 // pred_check_branch
      %31 = sbr.rel (0) target = $region21
    $region20: #{tpu_custom_call.1} parent=1 // pred_region
      _
    $region21: #{tpu_custom_call.1} parent=1 // pred_fallthru
      _
    // Predicated region
    $region22: #{tpu_custom_call.1} parent=1 // pred_check
      _
    $region23: #{tpu_custom_call.1} parent=1 // pred_check_branch
      %33 = sbr.rel (0) target = $region25
    $region24: #{tpu_custom_call.1} parent=1 // pred_region
      %34 = dma.done [#allocation3], 1024
    $region25: #{tpu_custom_call.1} parent=1 // pred_fallthru
      _
    %v36 = vld [vmem:[%s3] sm:$0x1]
    %v37 = vld [vmem:[%s3 + $0x1] sm:$0x1]
    %v38 = vld [vmem:[%s0] sm:$0xf]
    %v39 = vld [vmem:[%s0 + $0x4] sm:$0xf]
    %v40 = vld [vmem:[%s1] sm:$0xf]
    %v41 = vld [vmem:[%s1 + $0x4] sm:$0xf]
    %v42 = vld [vmem:[%s1 + $0x8] sm:$0xf]
    %v43 = vld [vmem:[%s1 + $0xc] sm:$0xf]
    %v44 = vld [vmem:[%s1 + $0x10] sm:$0xf]
    %v45 = vld [vmem:[%s1 + $0x14] sm:$0xf]
    %v46 = vld [vmem:[%s1 + $0x18] sm:$0xf]
    %v47 = vld [vmem:[%s1 + $0x1c] sm:$0xf]
    %v49 = vlaneseq
    %v50 = vshrl.u32 %v49, 7
    %v51 = vsub.s32 0, %v50
    %v52 = vrot.slane %v36, %v51
    %v56 = vunpack.c.l.b16 %v38
    %v57 = vunpack.c.l.b16 %v39
    %v58 = vpack.c.b16 %v57, %v56
    %v67 = vunpack.c.l.b16 %v40
    %v68 = vunpack.c.l.b16 %v41
    %v69 = vunpack.c.l.b16 %v42
    %v70 = vunpack.c.l.b16 %v43
    %v71 = vunpack.c.l.b16 %v44
    %v72 = vunpack.c.l.b16 %v45
    %v73 = vunpack.c.l.b16 %v46
    %v74 = vunpack.c.l.b16 %v47
    %v75 = vpack.c.b16 %v68, %v67
    %v76 = vpack.c.b16 %v70, %v69
    %v77 = vpack.c.b16 %v72, %v71
    %v78 = vpack.c.b16 %v74, %v73
    %vm83 = vcmask 523264
    %v85 = vsel %vm83, %v58, 0
    %87 = vmatprep.subr.bf16.mxu0 0
    %88 = vmatpush1.bf16.msra.mxu0 %v75
    %89 = vmatprep.subr.bf16.mxu0 0
    %90 = vmatpush1.bf16.msra.mxu0 %v76
    %91 = vmatprep.subr.bf16.mxu0 0
    %92 = vmatpush1.bf16.msra.mxu0 %v77
    %93 = vmatprep.subr.bf16.mxu0 0
    %94 = vmatpush1.bf16.msra.mxu0 %v78
    %95 = vmatprep.subr.bf16.mxu0 0
    %96 = vmatpush1.bf16.msra.mxu0 0
    %97 = vmatprep.subr.bf16.mxu0 0
    %98 = vmatpush1.bf16.msra.mxu0 0
    %99 = vmatprep.subr.bf16.mxu0 0
    %100 = vmatpush1.bf16.msra.mxu0 0
    %101 = vmatprep.subr.bf16.mxu0 0
    %102 = vmatpush1.bf16.msra.mxu0 0
    %103 = vmatprep.subr.bf16.mxu0 0
    %104 = vmatpush1.bf16.msra.mxu0 0
    %105 = vmatprep.subr.bf16.mxu0 0
    %106 = vmatpush1.bf16.msra.mxu0 0
    %107 = vmatprep.subr.bf16.mxu0 0
    %108 = vmatpush1.bf16.msra.mxu0 0
    %109 = vmatprep.subr.bf16.mxu0 0
    %110 = vmatpush1.bf16.msra.mxu0 0
    %111 = vmatprep.subr.bf16.mxu0 0
    %112 = vmatpush1.bf16.msra.mxu0 0
    %113 = vmatprep.subr.bf16.mxu0 0
    %114 = vmatpush1.bf16.msra.mxu0 0
    %115 = vmatprep.subr.bf16.mxu0 0
    %116 = vmatpush1.bf16.msra.mxu0 0
    %117 = vmatprep.subr.bf16.mxu0 0
    %118 = vmatpush1.bf16.msra.mxu0 0
    %119 = vmatprep.mubr.bf16.mxu0 0
    %120 = vmatmul.mubr.bf16.gmra.mrb[0].mxu0 %v85
    %v121 = vpop.f32.mrb[0].mxu0
    %v122 = vadd.f32 %v52, %v121
    %v123 = vpop.f32.mrb[0].mxu0
    %v124 = vpop.f32.mrb[0].mxu0
    %v125 = vadd.f32 %v52, %v124
    %v126 = vpop.f32.mrb[0].mxu0
    %127 = vdwg.mxu0
    %v128 = vld [vmem:[#allocation2] sm:$0xff]
    %v129 = vld [vmem:[#allocation2 + $0x8] sm:$0xff]
    %v130 = vld [vmem:[#allocation2 + $0x10] sm:$0xff]
    %v131 = vld [vmem:[#allocation2 + $0x18] sm:$0xff]
    %v132 = vld [vmem:[#allocation2 + $0x20] sm:$0xff]
    %v133 = vld [vmem:[#allocation2 + $0x28] sm:$0xff]
    %v134 = vld [vmem:[#allocation2 + $0x30] sm:$0xff]
    %v135 = vld [vmem:[#allocation2 + $0x38] sm:$0xff]
    %v136 = vpack.c.bf16 0.0, 0.0
    %v145 = vunpack.c.l.b16 %v128
    %v146 = vunpack.c.h.b16 %v128
    %v147 = vunpack.c.l.b16 %v129
    %v148 = vunpack.c.h.b16 %v129
    %v149 = vunpack.c.l.b16 %v130
    %v150 = vunpack.c.h.b16 %v130
    %v151 = vunpack.c.l.b16 %v131
    %v152 = vunpack.c.h.b16 %v131
    %v153 = vunpack.c.l.b16 %v132
    %v154 = vunpack.c.h.b16 %v132
    %v155 = vunpack.c.l.b16 %v133
    %v156 = vunpack.c.h.b16 %v133
    %v157 = vunpack.c.l.b16 %v134
    %v158 = vunpack.c.h.b16 %v134
    %v159 = vunpack.c.l.b16 %v135
    %v160 = vunpack.c.h.b16 %v135
    %v161 = vpack.c.b16 %v147, %v145
    %v162 = vpack.c.b16 %v148, %v146
    %v163 = vpack.c.b16 %v151, %v149
    %v164 = vpack.c.b16 %v152, %v150
    %v165 = vpack.c.b16 %v155, %v153
    %v166 = vpack.c.b16 %v156, %v154
    %v167 = vpack.c.b16 %v159, %v157
    %v168 = vpack.c.b16 %v160, %v158
    %v178 = vsel %vm83, %v136, 0
    %180 = vmatprep.subr.bf16.mxu0 %v162
    %181 = vmatpush1.bf16.msra.mxu0 %v161
    %182 = vmatprep.subr.bf16.mxu0 %v164
    %183 = vmatpush1.bf16.msra.mxu0 %v163
    %184 = vmatprep.subr.bf16.mxu0 %v166
    %185 = vmatpush1.bf16.msra.mxu0 %v165
    %186 = vmatprep.subr.bf16.mxu0 %v168
    %187 = vmatpush1.bf16.msra.mxu0 %v167
    %188 = vmatprep.subr.bf16.mxu0 0
    %189 = vmatpush1.bf16.msra.mxu0 0
    %190 = vmatprep.subr.bf16.mxu0 0
    %191 = vmatpush1.bf16.msra.mxu0 0
    %192 = vmatprep.subr.bf16.mxu0 0
    %193 = vmatpush1.bf16.msra.mxu0 0
    %194 = vmatprep.subr.bf16.mxu0 0
    %195 = vmatpush1.bf16.msra.mxu0 0
    %196 = vmatprep.subr.bf16.mxu0 0
    %197 = vmatpush1.bf16.msra.mxu0 0
    %198 = vmatprep.subr.bf16.mxu0 0
    %199 = vmatpush1.bf16.msra.mxu0 0
    %200 = vmatprep.subr.bf16.mxu0 0
    %201 = vmatpush1.bf16.msra.mxu0 0
    %202 = vmatprep.subr.bf16.mxu0 0
    %203 = vmatpush1.bf16.msra.mxu0 0
    %204 = vmatprep.subr.bf16.mxu0 0
    %205 = vmatpush1.bf16.msra.mxu0 0
    %206 = vmatprep.subr.bf16.mxu0 0
    %207 = vmatpush1.bf16.msra.mxu0 0
    %208 = vmatprep.subr.bf16.mxu0 0
    %209 = vmatpush1.bf16.msra.mxu0 0
    %210 = vmatprep.subr.bf16.mxu0 0
    %211 = vmatpush1.bf16.msra.mxu0 0
    %212 = vmatprep.mubr.bf16.mxu0 0
    %213 = vmatmul.mubr.bf16.gmra.mrb[0].mxu0 %v178
    %v214 = vpop.f32.mrb[0].mxu0
    %v215 = vadd.f32 0.0, %v214
    %v216 = vpop.f32.mrb[0].mxu0
    %v217 = vpop.f32.mrb[0].mxu0
    %v218 = vpop.f32.mrb[0].mxu0
    %219 = vdwg.mxu0
    %v220 = vadd.f32 %v122, %v215
    %v221 = vxor.u32 %v220, 2147483648
    %v222 = vmul.f32 %v221, 1.442695
    %v223 = vpow.pop %v222
    %v224 = vadd.f32 %v223, 1.0
    %v225 = vrcp.pop %v224
    %v226 = vmul.f32 1.0, %v225
    %v227 = vtanh.pop %v220
    %v228 = vmul.f32 %v226, 0.0
    %230 = vrot.lane.b32.xlu0 %v227, 64
    %v231 = vpop.permute.xlu0 %230
    %v233 = vmul.f32 %v226, %v231
    %235 = vrot.lane.b32.xlu0 %v233, 32
    %v236 = vpop.permute.xlu0 %235
    %v238 = vadd.f32 %v228, %v236
    %v239 = vtanh.pop %v238
    %241 = vrot.lane.b32.xlu0 %v239, 64
    %v242 = vpop.permute.xlu0 %241
    %v244 = vmul.f32 %v226, %v242
    %246 = vrot.lane.b32.xlu0 %v244, 32
    %v247 = vpop.permute.xlu0 %246
    %vm249 = vcmask 261120
    %v250 = vsel %vm249, %v247, 0.0
    %v251 = vpack.c.bf16 %v250, %v250
    %v253 = vsel %vm83, %v251, 0
    %255 = vmatprep.subr.bf16.mxu0 %v162
    %256 = vmatpush1.bf16.msra.mxu0 %v161
    %257 = vmatprep.subr.bf16.mxu0 %v164
    %258 = vmatpush1.bf16.msra.mxu0 %v163
    %259 = vmatprep.subr.bf16.mxu0 %v166
    %260 = vmatpush1.bf16.msra.mxu0 %v165
    %261 = vmatprep.subr.bf16.mxu0 %v168
    %262 = vmatpush1.bf16.msra.mxu0 %v167
    %263 = vmatprep.subr.bf16.mxu0 0
    %264 = vmatpush1.bf16.msra.mxu0 0
    %265 = vmatprep.subr.bf16.mxu0 0
    %266 = vmatpush1.bf16.msra.mxu0 0
    %267 = vmatprep.subr.bf16.mxu0 0
    %268 = vmatpush1.bf16.msra.mxu0 0
    %269 = vmatprep.subr.bf16.mxu0 0
    %270 = vmatpush1.bf16.msra.mxu0 0
    %271 = vmatprep.subr.bf16.mxu0 0
    %272 = vmatpush1.bf16.msra.mxu0 0
    %273 = vmatprep.subr.bf16.mxu0 0
    %274 = vmatpush1.bf16.msra.mxu0 0
    %275 = vmatprep.subr.bf16.mxu0 0
    %276 = vmatpush1.bf16.msra.mxu0 0
    %277 = vmatprep.subr.bf16.mxu0 0
    %278 = vmatpush1.bf16.msra.mxu0 0
    %279 = vmatprep.subr.bf16.mxu0 0
    %280 = vmatpush1.bf16.msra.mxu0 0
    %281 = vmatprep.subr.bf16.mxu0 0
    %282 = vmatpush1.bf16.msra.mxu0 0
    %283 = vmatprep.subr.bf16.mxu0 0
    %284 = vmatpush1.bf16.msra.mxu0 0
    %285 = vmatprep.subr.bf16.mxu0 0
    %286 = vmatpush1.bf16.msra.mxu0 0
    %287 = vmatprep.mubr.bf16.mxu0 0
    %288 = vmatmul.mubr.bf16.gmra.mrb[0].mxu0 %v253
    %v289 = vpop.f32.mrb[0].mxu0
    %v290 = vadd.f32 0.0, %v289
    %v291 = vpop.f32.mrb[0].mxu0
    %v292 = vadd.f32 0.0, %v291
    %v293 = vpop.f32.mrb[0].mxu0
    %v294 = vpop.f32.mrb[0].mxu0
    %295 = vdwg.mxu0
    %v297 = vlaneseq
    %v298 = vshrl.u32 %v297, 7
    %v299 = vsub.s32 0, %v298
    %v300 = vrot.slane %v37, %v299
    %v302 = vadd.f32 %v292, %v300
    %v303 = vxor.u32 %v302, 2147483648
    %v304 = vmul.f32 %v303, 1.442695
    %v305 = vpow.pop %v304
    %v306 = vadd.f32 %v305, 1.0
    %v307 = vrcp.pop %v306
    %v308 = vmul.f32 1.0, %v307
    %v309 = vtanh.pop %v302
    %v310 = vmul.f32 %v308, 0.0
    %312 = vrot.lane.b32.xlu0 %v309, 64
    %v313 = vpop.permute.xlu0 %312
    %v315 = vmul.f32 %v308, %v313
    %317 = vrot.lane.b32.xlu0 %v315, 32
    %v318 = vpop.permute.xlu0 %317
    %v320 = vadd.f32 %v310, %v318
    %v321 = vtanh.pop %v320
    %323 = vrot.lane.b32.xlu0 %v321, 64
    %v324 = vpop.permute.xlu0 %323
    %v326 = vmul.f32 %v308, %v324
    %v328 = vrot.slane %v290, 6
    %v330 = vadd.f32 %v122, %v328
    %v331 = vxor.u32 %v330, 2147483648
    %v332 = vmul.f32 %v331, 1.442695
    %v333 = vpow.pop %v332
    %v334 = vadd.f32 %v333, 1.0
    %v335 = vrcp.pop %v334
    %v336 = vmul.f32 1.0, %v335
    %v337 = vtanh.pop %v330
    %v339 = vrot.slane %v238, 6
    %v341 = vmul.f32 %v336, %v339
    %343 = vrot.lane.b32.xlu0 %v337, 64
    %v344 = vpop.permute.xlu0 %343
    %v346 = vmul.f32 %v336, %v344
    %348 = vrot.lane.b32.xlu0 %v346, 32
    %v349 = vpop.permute.xlu0 %348
    %v351 = vadd.f32 %v341, %v349
    %v352 = vtanh.pop %v351
    %354 = vrot.lane.b32.xlu0 %v352, 64
    %v355 = vpop.permute.xlu0 %354
    %v357 = vmul.f32 %v336, %v355
    %359 = vrot.lane.b32.xlu0 %v357, 32
    %v360 = vpop.permute.xlu0 %359
    %v363 = vrot.slane %v326, 6
    %364 = vrot.lane.b32.xlu0 %v363, 64
    %v365 = vpop.permute.xlu0 %364
    %v367 = vsel %vm249, %v360, %v365
    %v368 = vpack.c.bf16 %v367, %v367
    %v370 = vrot.slane %v368, 1
    %v372 = vsel %vm83, %v370, 0
    %374 = vmatprep.subr.bf16.mxu0 %v162
    %375 = vmatpush1.bf16.msra.mxu0 %v161
    %376 = vmatprep.subr.bf16.mxu0 %v164
    %377 = vmatpush1.bf16.msra.mxu0 %v163
    %378 = vmatprep.subr.bf16.mxu0 %v166
    %379 = vmatpush1.bf16.msra.mxu0 %v165
    %380 = vmatprep.subr.bf16.mxu0 %v168
    %381 = vmatpush1.bf16.msra.mxu0 %v167
    %382 = vmatprep.subr.bf16.mxu0 0
    %383 = vmatpush1.bf16.msra.mxu0 0
    %384 = vmatprep.subr.bf16.mxu0 0
    %385 = vmatpush1.bf16.msra.mxu0 0
    %386 = vmatprep.subr.bf16.mxu0 0
    %387 = vmatpush1.bf16.msra.mxu0 0
    %388 = vmatprep.subr.bf16.mxu0 0
    %389 = vmatpush1.bf16.msra.mxu0 0
    %390 = vmatprep.subr.bf16.mxu0 0
    %391 = vmatpush1.bf16.msra.mxu0 0
    %392 = vmatprep.subr.bf16.mxu0 0
    %393 = vmatpush1.bf16.msra.mxu0 0
    %394 = vmatprep.subr.bf16.mxu0 0
    %395 = vmatpush1.bf16.msra.mxu0 0
    %396 = vmatprep.subr.bf16.mxu0 0
    %397 = vmatpush1.bf16.msra.mxu0 0
    %398 = vmatprep.subr.bf16.mxu0 0
    %399 = vmatpush1.bf16.msra.mxu0 0
    %400 = vmatprep.subr.bf16.mxu0 0
    %401 = vmatpush1.bf16.msra.mxu0 0
    %402 = vmatprep.subr.bf16.mxu0 0
    %403 = vmatpush1.bf16.msra.mxu0 0
    %404 = vmatprep.subr.bf16.mxu0 0
    %405 = vmatpush1.bf16.msra.mxu0 0
    %406 = vmatprep.mubr.bf16.mxu0 0
    %407 = vmatmul.mubr.bf16.gmra.mrb[0].mxu0 %v372
    %v408 = vpop.f32.mrb[0].mxu0
    %v409 = vadd.f32 0.0, %v408
    %v410 = vpop.f32.mrb[0].mxu0
    %v411 = vadd.f32 0.0, %v410
    %v412 = vpop.f32.mrb[0].mxu0
    %v413 = vpop.f32.mrb[0].mxu0
    %414 = vdwg.mxu0
    %v415 = vadd.f32 %v411, %v300
    %v416 = vxor.u32 %v415, 2147483648
    %v417 = vmul.f32 %v416, 1.442695
    %v418 = vpow.pop %v417
    %v419 = vadd.f32 %v418, 1.0
    %v420 = vrcp.pop %v419
    %v421 = vmul.f32 1.0, %v420
    %v422 = vtanh.pop %v415
    %v423 = vmul.f32 %v421, %v320
    %425 = vrot.lane.b32.xlu0 %v422, 64
    %v426 = vpop.permute.xlu0 %425
    %v428 = vmul.f32 %v421, %v426
    %430 = vrot.lane.b32.xlu0 %v428, 32
    %v431 = vpop.permute.xlu0 %430
    %v433 = vadd.f32 %v423, %v431
    %v434 = vtanh.pop %v433
    %436 = vrot.lane.b32.xlu0 %v434, 64
    %v437 = vpop.permute.xlu0 %436
    %v439 = vmul.f32 %v421, %v437
    %v441 = vrot.slane %v409, 4
    %v443 = vadd.f32 %v122, %v441
    %v444 = vxor.u32 %v443, 2147483648
    %v445 = vmul.f32 %v444, 1.442695
    %v446 = vpow.pop %v445
    %v447 = vadd.f32 %v446, 1.0
    %v448 = vrcp.pop %v447
    %v449 = vmul.f32 1.0, %v448
    %v450 = vtanh.pop %v443
    %v452 = vrot.slane %v351, 6
    %v454 = vmul.f32 %v449, %v452
    %456 = vrot.lane.b32.xlu0 %v450, 64
    %v457 = vpop.permute.xlu0 %456
    %v459 = vmul.f32 %v449, %v457
    %461 = vrot.lane.b32.xlu0 %v459, 32
    %v462 = vpop.permute.xlu0 %461
    %v464 = vadd.f32 %v454, %v462
    %v465 = vtanh.pop %v464
    %467 = vrot.lane.b32.xlu0 %v465, 64
    %v468 = vpop.permute.xlu0 %467
    %v470 = vmul.f32 %v449, %v468
    %472 = vrot.lane.b32.xlu0 %v470, 32
    %v473 = vpop.permute.xlu0 %472
    %v476 = vrot.slane %v439, 4
    %477 = vrot.lane.b32.xlu0 %v476, 64
    %v478 = vpop.permute.xlu0 %477
    %v480 = vsel %vm249, %v473, %v478
    %v481 = vpack.c.bf16 %v480, %v480
    %v483 = vrot.slane %v481, 2
    %v485 = vsel %vm83, %v483, 0
    %487 = vmatprep.subr.bf16.mxu0 %v162
    %488 = vmatpush1.bf16.msra.mxu0 %v161
    %489 = vmatprep.subr.bf16.mxu0 %v164
    %490 = vmatpush1.bf16.msra.mxu0 %v163
    %491 = vmatprep.subr.bf16.mxu0 %v166
    %492 = vmatpush1.bf16.msra.mxu0 %v165
    %493 = vmatprep.subr.bf16.mxu0 %v168
    %494 = vmatpush1.bf16.msra.mxu0 %v167
    %495 = vmatprep.subr.bf16.mxu0 0
    %496 = vmatpush1.bf16.msra.mxu0 0
    %497 = vmatprep.subr.bf16.mxu0 0
    %498 = vmatpush1.bf16.msra.mxu0 0
    %499 = vmatprep.subr.bf16.mxu0 0
    %500 = vmatpush1.bf16.msra.mxu0 0
    %501 = vmatprep.subr.bf16.mxu0 0
    %502 = vmatpush1.bf16.msra.mxu0 0
    %503 = vmatprep.subr.bf16.mxu0 0
    %504 = vmatpush1.bf16.msra.mxu0 0
    %505 = vmatprep.subr.bf16.mxu0 0
    %506 = vmatpush1.bf16.msra.mxu0 0
    %507 = vmatprep.subr.bf16.mxu0 0
    %508 = vmatpush1.bf16.msra.mxu0 0
    %509 = vmatprep.subr.bf16.mxu0 0
    %510 = vmatpush1.bf16.msra.mxu0 0
    %511 = vmatprep.subr.bf16.mxu0 0
    %512 = vmatpush1.bf16.msra.mxu0 0
    %513 = vmatprep.subr.bf16.mxu0 0
    %514 = vmatpush1.bf16.msra.mxu0 0
    %515 = vmatprep.subr.bf16.mxu0 0
    %516 = vmatpush1.bf16.msra.mxu0 0
    %517 = vmatprep.subr.bf16.mxu0 0
    %518 = vmatpush1.bf16.msra.mxu0 0
    %519 = vmatprep.mubr.bf16.mxu0 0
    %520 = vmatmul.mubr.bf16.gmra.mrb[0].mxu0 %v485
    %v521 = vpop.f32.mrb[0].mxu0
    %v522 = vadd.f32 0.0, %v521
    %v523 = vpop.f32.mrb[0].mxu0
    %v524 = vadd.f32 0.0, %v523
    %v525 = vpop.f32.mrb[0].mxu0
    %v526 = vpop.f32.mrb[0].mxu0
    %527 = vdwg.mxu0
    %v528 = vadd.f32 %v524, %v300
    %v529 = vxor.u32 %v528, 2147483648
    %v530 = vmul.f32 %v529, 1.442695
    %v531 = vpow.pop %v530
    %v532 = vadd.f32 %v531, 1.0
    %v533 = vrcp.pop %v532
    %v534 = vmul.f32 1.0, %v533
    %v535 = vtanh.pop %v528
    %v536 = vmul.f32 %v534, %v433
    %538 = vrot.lane.b32.xlu0 %v535, 64
    %v539 = vpop.permute.xlu0 %538
    %v541 = vmul.f32 %v534, %v539
    %543 = vrot.lane.b32.xlu0 %v541, 32
    %v544 = vpop.permute.xlu0 %543
    %v546 = vadd.f32 %v536, %v544
    %v547 = vtanh.pop %v546
    %549 = vrot.lane.b32.xlu0 %v547, 64
    %v550 = vpop.permute.xlu0 %549
    %v552 = vmul.f32 %v534, %v550
    %v554 = vrot.slane %v522, 2
    %v556 = vadd.f32 %v122, %v554
    %v557 = vxor.u32 %v556, 2147483648
    %v558 = vmul.f32 %v557, 1.442695
    %v559 = vpow.pop %v558
    %v560 = vadd.f32 %v559, 1.0
    %v561 = vrcp.pop %v560
    %v562 = vmul.f32 1.0, %v561
    %v563 = vtanh.pop %v556
    %v565 = vrot.slane %v464, 6
    %v567 = vmul.f32 %v562, %v565
    %569 = vrot.lane.b32.xlu0 %v563, 64
    %v570 = vpop.permute.xlu0 %569
    %v572 = vmul.f32 %v562, %v570
    %574 = vrot.lane.b32.xlu0 %v572, 32
    %v575 = vpop.permute.xlu0 %574
    %v577 = vadd.f32 %v567, %v575
    %v578 = vtanh.pop %v577
    %580 = vrot.lane.b32.xlu0 %v578, 64
    %v581 = vpop.permute.xlu0 %580
    %v583 = vmul.f32 %v562, %v581
    %585 = vrot.lane.b32.xlu0 %v583, 32
    %v586 = vpop.permute.xlu0 %585
    %v589 = vrot.slane %v552, 2
    %590 = vrot.lane.b32.xlu0 %v589, 64
    %v591 = vpop.permute.xlu0 %590
    %v593 = vsel %vm249, %v586, %v591
    %v594 = vpack.c.bf16 %v593, %v593
    %v596 = vrot.slane %v594, 3
    %v598 = vsel %vm83, %v596, 0
    %600 = vmatprep.subr.bf16.mxu0 %v162
    %601 = vmatpush1.bf16.msra.mxu0 %v161
    %602 = vmatprep.subr.bf16.mxu0 %v164
    %603 = vmatpush1.bf16.msra.mxu0 %v163
    %604 = vmatprep.subr.bf16.mxu0 %v166
    %605 = vmatpush1.bf16.msra.mxu0 %v165
    %606 = vmatprep.subr.bf16.mxu0 %v168
    %607 = vmatpush1.bf16.msra.mxu0 %v167
    %608 = vmatprep.subr.bf16.mxu0 0
    %609 = vmatpush1.bf16.msra.mxu0 0
    %610 = vmatprep.subr.bf16.mxu0 0
    %611 = vmatpush1.bf16.msra.mxu0 0
    %612 = vmatprep.subr.bf16.mxu0 0
    %613 = vmatpush1.bf16.msra.mxu0 0
    %614 = vmatprep.subr.bf16.mxu0 0
    %615 = vmatpush1.bf16.msra.mxu0 0
    %616 = vmatprep.subr.bf16.mxu0 0
    %617 = vmatpush1.bf16.msra.mxu0 0
    %618 = vmatprep.subr.bf16.mxu0 0
    %619 = vmatpush1.bf16.msra.mxu0 0
    %620 = vmatprep.subr.bf16.mxu0 0
    %621 = vmatpush1.bf16.msra.mxu0 0
    %622 = vmatprep.subr.bf16.mxu0 0
    %623 = vmatpush1.bf16.msra.mxu0 0
    %624 = vmatprep.subr.bf16.mxu0 0
    %625 = vmatpush1.bf16.msra.mxu0 0
    %626 = vmatprep.subr.bf16.mxu0 0
    %627 = vmatpush1.bf16.msra.mxu0 0
    %628 = vmatprep.subr.bf16.mxu0 0
    %629 = vmatpush1.bf16.msra.mxu0 0
    %630 = vmatprep.subr.bf16.mxu0 0
    %631 = vmatpush1.bf16.msra.mxu0 0
    %632 = vmatprep.mubr.bf16.mxu0 0
    %633 = vmatmul.mubr.bf16.gmra.mrb[0].mxu0 %v598
    %v634 = vpop.f32.mrb[0].mxu0
    %v635 = vadd.f32 0.0, %v634
    %v636 = vpop.f32.mrb[0].mxu0
    %v637 = vadd.f32 0.0, %v636
    %v638 = vpop.f32.mrb[0].mxu0
    %v639 = vpop.f32.mrb[0].mxu0
    %640 = vdwg.mxu0
    %v641 = vadd.f32 %v637, %v300
    %v642 = vxor.u32 %v641, 2147483648
    %v643 = vmul.f32 %v642, 1.442695
    %v644 = vpow.pop %v643
    %v645 = vadd.f32 %v644, 1.0
    %v646 = vrcp.pop %v645
    %v647 = vmul.f32 1.0, %v646
    %v648 = vtanh.pop %v641
    %v649 = vmul.f32 %v647, %v546
    %651 = vrot.lane.b32.xlu0 %v648, 64
    %v652 = vpop.permute.xlu0 %651
    %v654 = vmul.f32 %v647, %v652
    %656 = vrot.lane.b32.xlu0 %v654, 32
    %v657 = vpop.permute.xlu0 %656
    %v659 = vadd.f32 %v649, %v657
    %v660 = vtanh.pop %v659
    %662 = vrot.lane.b32.xlu0 %v660, 64
    %v663 = vpop.permute.xlu0 %662
    %v665 = vmul.f32 %v647, %v663
    %v666 = vadd.f32 %v125, %v635
    %v667 = vxor.u32 %v666, 2147483648
    %v668 = vmul.f32 %v667, 1.442695
    %v669 = vpow.pop %v668
    %v670 = vadd.f32 %v669, 1.0
    %v671 = vrcp.pop %v670
    %v672 = vmul.f32 1.0, %v671
    %v673 = vtanh.pop %v666
    %v675 = vrot.slane %v577, 6
    %v677 = vmul.f32 %v672, %v675
    %679 = vrot.lane.b32.xlu0 %v673, 64
    %v680 = vpop.permute.xlu0 %679
    %v682 = vmul.f32 %v672, %v680
    %684 = vrot.lane.b32.xlu0 %v682, 32
    %v685 = vpop.permute.xlu0 %684
    %v687 = vadd.f32 %v677, %v685
    %v688 = vtanh.pop %v687
    %690 = vrot.lane.b32.xlu0 %v688, 64
    %v691 = vpop.permute.xlu0 %690
    %v693 = vmul.f32 %v672, %v691
    %695 = vrot.lane.b32.xlu0 %v693, 32
    %v696 = vpop.permute.xlu0 %695
    %699 = vrot.lane.b32.xlu0 %v665, 64
    %v700 = vpop.permute.xlu0 %699
    %v702 = vsel %vm249, %v696, %v700
    %v703 = vpack.c.bf16 %v702, %v702
    %v705 = vsel %vm83, %v703, 0
    %707 = vmatprep.subr.bf16.mxu0 %v162
    %708 = vmatpush1.bf16.msra.mxu0 %v161
    %709 = vmatprep.subr.bf16.mxu0 %v164
    %710 = vmatpush1.bf16.msra.mxu0 %v163
    %711 = vmatprep.subr.bf16.mxu0 %v166
    %712 = vmatpush1.bf16.msra.mxu0 %v165
    %713 = vmatprep.subr.bf16.mxu0 %v168
    %714 = vmatpush1.bf16.msra.mxu0 %v167
    %715 = vmatprep.subr.bf16.mxu0 0
    %716 = vmatpush1.bf16.msra.mxu0 0
    %717 = vmatprep.subr.bf16.mxu0 0
    %718 = vmatpush1.bf16.msra.mxu0 0
    %719 = vmatprep.subr.bf16.mxu0 0
    %720 = vmatpush1.bf16.msra.mxu0 0
    %721 = vmatprep.subr.bf16.mxu0 0
    %722 = vmatpush1.bf16.msra.mxu0 0
    %723 = vmatprep.subr.bf16.mxu0 0
    %724 = vmatpush1.bf16.msra.mxu0 0
    %725 = vmatprep.subr.bf16.mxu0 0
    %726 = vmatpush1.bf16.msra.mxu0 0
    %727 = vmatprep.subr.bf16.mxu0 0
    %728 = vmatpush1.bf16.msra.mxu0 0
    %729 = vmatprep.subr.bf16.mxu0 0
    %730 = vmatpush1.bf16.msra.mxu0 0
    %731 = vmatprep.subr.bf16.mxu0 0
    %732 = vmatpush1.bf16.msra.mxu0 0
    %733 = vmatprep.subr.bf16.mxu0 0
    %734 = vmatpush1.bf16.msra.mxu0 0
    %735 = vmatprep.subr.bf16.mxu0 0
    %736 = vmatpush1.bf16.msra.mxu0 0
    %737 = vmatprep.subr.bf16.mxu0 0
    %738 = vmatpush1.bf16.msra.mxu0 0
    %739 = vmatprep.mubr.bf16.mxu0 0
    %740 = vmatmul.mubr.bf16.gmra.mrb[0].mxu0 %v705
    %v741 = vpop.f32.mrb[0].mxu0
    %v742 = vadd.f32 0.0, %v741
    %v743 = vpop.f32.mrb[0].mxu0
    %v744 = vadd.f32 0.0, %v743
    %v745 = vpop.f32.mrb[0].mxu0
    %v746 = vpop.f32.mrb[0].mxu0
    %747 = vdwg.mxu0
    %v748 = vadd.f32 %v744, %v300
    %v749 = vxor.u32 %v748, 2147483648
    %v750 = vmul.f32 %v749, 1.442695
    %v751 = vpow.pop %v750
    %v752 = vadd.f32 %v751, 1.0
    %v753 = vrcp.pop %v752
    %v754 = vmul.f32 1.0, %v753
    %v755 = vtanh.pop %v748
    %v756 = vmul.f32 %v754, %v659
    %758 = vrot.lane.b32.xlu0 %v755, 64
    %v759 = vpop.permute.xlu0 %758
    %v761 = vmul.f32 %v754, %v759
    %763 = vrot.lane.b32.xlu0 %v761, 32
    %v764 = vpop.permute.xlu0 %763
    %v766 = vadd.f32 %v756, %v764
    %v767 = vtanh.pop %v766
    %769 = vrot.lane.b32.xlu0 %v767, 64
    %v770 = vpop.permute.xlu0 %769
    %v772 = vmul.f32 %v754, %v770
    %v774 = vrot.slane %v742, 6
    %v776 = vadd.f32 %v125, %v774
    %v777 = vxor.u32 %v776, 2147483648
    %v778 = vmul.f32 %v777, 1.442695
    %v779 = vpow.pop %v778
    %v780 = vadd.f32 %v779, 1.0
    %v781 = vrcp.pop %v780
    %v782 = vmul.f32 1.0, %v781
    %v783 = vtanh.pop %v776
    %v785 = vrot.slane %v687, 6
    %v787 = vmul.f32 %v782, %v785
    %789 = vrot.lane.b32.xlu0 %v783, 64
    %v790 = vpop.permute.xlu0 %789
    %v792 = vmul.f32 %v782, %v790
    %794 = vrot.lane.b32.xlu0 %v792, 32
    %v795 = vpop.permute.xlu0 %794
    %v797 = vadd.f32 %v787, %v795
    %v798 = vtanh.pop %v797
    %800 = vrot.lane.b32.xlu0 %v798, 64
    %v801 = vpop.permute.xlu0 %800
    %v803 = vmul.f32 %v782, %v801
    %805 = vrot.lane.b32.xlu0 %v803, 32
    %v806 = vpop.permute.xlu0 %805
    %v809 = vrot.slane %v772, 6
    %810 = vrot.lane.b32.xlu0 %v809, 64
    %v811 = vpop.permute.xlu0 %810
    %v813 = vsel %vm249, %v806, %v811
    %v814 = vpack.c.bf16 %v813, %v813
    %v816 = vrot.slane %v814, 1
    %v818 = vsel %vm83, %v816, 0
    %820 = vmatprep.subr.bf16.mxu0 %v162
    %821 = vmatpush1.bf16.msra.mxu0 %v161
    %822 = vmatprep.subr.bf16.mxu0 %v164
    %823 = vmatpush1.bf16.msra.mxu0 %v163
    %824 = vmatprep.subr.bf16.mxu0 %v166
    %825 = vmatpush1.bf16.msra.mxu0 %v165
    %826 = vmatprep.subr.bf16.mxu0 %v168
    %827 = vmatpush1.bf16.msra.mxu0 %v167
    %828 = vmatprep.subr.bf16.mxu0 0
    %829 = vmatpush1.bf16.msra.mxu0 0
    %830 = vmatprep.subr.bf16.mxu0 0
    %831 = vmatpush1.bf16.msra.mxu0 0
    %832 = vmatprep.subr.bf16.mxu0 0
    %833 = vmatpush1.bf16.msra.mxu0 0
    %834 = vmatprep.subr.bf16.mxu0 0
    %835 = vmatpush1.bf16.msra.mxu0 0
    %836 = vmatprep.subr.bf16.mxu0 0
    %837 = vmatpush1.bf16.msra.mxu0 0
    %838 = vmatprep.subr.bf16.mxu0 0
    %839 = vmatpush1.bf16.msra.mxu0 0
    %840 = vmatprep.subr.bf16.mxu0 0
    %841 = vmatpush1.bf16.msra.mxu0 0
    %842 = vmatprep.subr.bf16.mxu0 0
    %843 = vmatpush1.bf16.msra.mxu0 0
    %844 = vmatprep.subr.bf16.mxu0 0
    %845 = vmatpush1.bf16.msra.mxu0 0
    %846 = vmatprep.subr.bf16.mxu0 0
    %847 = vmatpush1.bf16.msra.mxu0 0
    %848 = vmatprep.subr.bf16.mxu0 0
    %849 = vmatpush1.bf16.msra.mxu0 0
    %850 = vmatprep.subr.bf16.mxu0 0
    %851 = vmatpush1.bf16.msra.mxu0 0
    %852 = vmatprep.mubr.bf16.mxu0 0
    %853 = vmatmul.mubr.bf16.gmra.mrb[0].mxu0 %v818
    %v854 = vpop.f32.mrb[0].mxu0
    %v855 = vadd.f32 0.0, %v854
    %v856 = vpop.f32.mrb[0].mxu0
    %v857 = vadd.f32 0.0, %v856
    %v858 = vpop.f32.mrb[0].mxu0
    %v859 = vpop.f32.mrb[0].mxu0
    %860 = vdwg.mxu0
    %v861 = vadd.f32 %v857, %v300
    %v862 = vxor.u32 %v861, 2147483648
    %v863 = vmul.f32 %v862, 1.442695
    %v864 = vpow.pop %v863
    %v865 = vadd.f32 %v864, 1.0
    %v866 = vrcp.pop %v865
    %v867 = vmul.f32 1.0, %v866
    %v868 = vtanh.pop %v861
    %v869 = vmul.f32 %v867, %v766
    %871 = vrot.lane.b32.xlu0 %v868, 64
    %v872 = vpop.permute.xlu0 %871
    %v874 = vmul.f32 %v867, %v872
    %876 = vrot.lane.b32.xlu0 %v874, 32
    %v877 = vpop.permute.xlu0 %876
    %v879 = vadd.f32 %v869, %v877
    %v880 = vtanh.pop %v879
    %882 = vrot.lane.b32.xlu0 %v880, 64
    %v883 = vpop.permute.xlu0 %882
    %v885 = vmul.f32 %v867, %v883
    %v887 = vrot.slane %v855, 4
    %v889 = vadd.f32 %v125, %v887
    %v890 = vxor.u32 %v889, 2147483648
    %v891 = vmul.f32 %v890, 1.442695
    %v892 = vpow.pop %v891
    %v893 = vadd.f32 %v892, 1.0
    %v894 = vrcp.pop %v893
    %v895 = vmul.f32 1.0, %v894
    %v896 = vtanh.pop %v889
    %v898 = vrot.slane %v797, 6
    %v900 = vmul.f32 %v895, %v898
    %902 = vrot.lane.b32.xlu0 %v896, 64
    %v903 = vpop.permute.xlu0 %902
    %v905 = vmul.f32 %v895, %v903
    %907 = vrot.lane.b32.xlu0 %v905, 32
    %v908 = vpop.permute.xlu0 %907
    %v910 = vadd.f32 %v900, %v908
    %v911 = vtanh.pop %v910
    %913 = vrot.lane.b32.xlu0 %v911, 64
    %v914 = vpop.permute.xlu0 %913
    %v916 = vmul.f32 %v895, %v914
    %918 = vrot.lane.b32.xlu0 %v916, 32
    %v919 = vpop.permute.xlu0 %918
    %v922 = vrot.slane %v885, 4
    %923 = vrot.lane.b32.xlu0 %v922, 64
    %v924 = vpop.permute.xlu0 %923
    %v926 = vsel %vm249, %v919, %v924
    %v927 = vpack.c.bf16 %v926, %v926
    %v929 = vrot.slane %v927, 2
    %v931 = vsel %vm83, %v929, 0
    %933 = vmatprep.subr.bf16.mxu0 %v162
    %934 = vmatpush1.bf16.msra.mxu0 %v161
    %935 = vmatprep.subr.bf16.mxu0 %v164
    %936 = vmatpush1.bf16.msra.mxu0 %v163
    %937 = vmatprep.subr.bf16.mxu0 %v166
    %938 = vmatpush1.bf16.msra.mxu0 %v165
    %939 = vmatprep.subr.bf16.mxu0 %v168
    %940 = vmatpush1.bf16.msra.mxu0 %v167
    %941 = vmatprep.subr.bf16.mxu0 0
    %942 = vmatpush1.bf16.msra.mxu0 0
    %943 = vmatprep.subr.bf16.mxu0 0
    %944 = vmatpush1.bf16.msra.mxu0 0
    %945 = vmatprep.subr.bf16.mxu0 0
    %946 = vmatpush1.bf16.msra.mxu0 0
    %947 = vmatprep.subr.bf16.mxu0 0
    %948 = vmatpush1.bf16.msra.mxu0 0
    %949 = vmatprep.subr.bf16.mxu0 0
    %950 = vmatpush1.bf16.msra.mxu0 0
    %951 = vmatprep.subr.bf16.mxu0 0
    %952 = vmatpush1.bf16.msra.mxu0 0
    %953 = vmatprep.subr.bf16.mxu0 0
    %954 = vmatpush1.bf16.msra.mxu0 0
    %955 = vmatprep.subr.bf16.mxu0 0
    %956 = vmatpush1.bf16.msra.mxu0 0
    %957 = vmatprep.subr.bf16.mxu0 0
    %958 = vmatpush1.bf16.msra.mxu0 0
    %959 = vmatprep.subr.bf16.mxu0 0
    %960 = vmatpush1.bf16.msra.mxu0 0
    %961 = vmatprep.subr.bf16.mxu0 0
    %962 = vmatpush1.bf16.msra.mxu0 0
    %963 = vmatprep.subr.bf16.mxu0 0
    %964 = vmatpush1.bf16.msra.mxu0 0
    %965 = vmatprep.mubr.bf16.mxu0 0
    %966 = vmatmul.mubr.bf16.gmra.mrb[0].mxu0 %v931
    %v967 = vpop.f32.mrb[0].mxu0
    %v968 = vadd.f32 0.0, %v967
    %v969 = vpop.f32.mrb[0].mxu0
    %v970 = vadd.f32 0.0, %v969
    %v971 = vpop.f32.mrb[0].mxu0
    %v972 = vpop.f32.mrb[0].mxu0
    %973 = vdwg.mxu0
    %v974 = vadd.f32 %v970, %v300
    %v975 = vxor.u32 %v974, 2147483648
    %v976 = vmul.f32 %v975, 1.442695
    %v977 = vpow.pop %v976
    %v978 = vadd.f32 %v977, 1.0
    %v979 = vrcp.pop %v978
    %v980 = vmul.f32 1.0, %v979
    %v981 = vtanh.pop %v974
    %v982 = vmul.f32 %v980, %v879
    %984 = vrot.lane.b32.xlu0 %v981, 64
    %v985 = vpop.permute.xlu0 %984
    %v987 = vmul.f32 %v980, %v985
    %989 = vrot.lane.b32.xlu0 %v987, 32
    %v990 = vpop.permute.xlu0 %989
    %v992 = vadd.f32 %v982, %v990
    %v993 = vtanh.pop %v992
    %995 = vrot.lane.b32.xlu0 %v993, 64
    %v996 = vpop.permute.xlu0 %995
    %v998 = vmul.f32 %v980, %v996
    %v1000 = vrot.slane %v968, 2
    %v1002 = vadd.f32 %v125, %v1000
    %v1003 = vxor.u32 %v1002, 2147483648
    %v1004 = vmul.f32 %v1003, 1.442695
    %v1005 = vpow.pop %v1004
    %v1006 = vadd.f32 %v1005, 1.0
    %v1007 = vrcp.pop %v1006
    %v1008 = vmul.f32 1.0, %v1007
    %v1009 = vtanh.pop %v1002
    %v1011 = vrot.slane %v910, 6
    %v1013 = vmul.f32 %v1008, %v1011
    %1015 = vrot.lane.b32.xlu0 %v1009, 64
    %v1016 = vpop.permute.xlu0 %1015
    %v1018 = vmul.f32 %v1008, %v1016
    %1020 = vrot.lane.b32.xlu0 %v1018, 32
    %v1021 = vpop.permute.xlu0 %1020
    %v1023 = vadd.f32 %v1013, %v1021
    %v1024 = vtanh.pop %v1023
    %1026 = vrot.lane.b32.xlu0 %v1024, 64
    %v1027 = vpop.permute.xlu0 %1026
    %v1029 = vmul.f32 %v1008, %v1027
    %1031 = vrot.lane.b32.xlu0 %v1029, 32
    %v1032 = vpop.permute.xlu0 %1031
    %v1035 = vrot.slane %v998, 2
    %1036 = vrot.lane.b32.xlu0 %v1035, 64
    %v1037 = vpop.permute.xlu0 %1036
    %v1039 = vsel %vm249, %v1032, %v1037
    %v1040 = vpack.c.bf16 %v1039, %v1039
    %v1042 = vrot.slane %v1040, 3
    %v1044 = vsel %vm83, %v1042, 0
    %1046 = vmatprep.subr.bf16.mxu0 0
    %1047 = vmatpush1.bf16.msra.mxu0 %v162
    %1048 = vmatprep.subr.bf16.mxu0 0
    %1049 = vmatpush1.bf16.msra.mxu0 %v164
    %1050 = vmatprep.subr.bf16.mxu0 0
    %1051 = vmatpush1.bf16.msra.mxu0 %v166
    %1052 = vmatprep.subr.bf16.mxu0 0
    %1053 = vmatpush1.bf16.msra.mxu0 %v168
    %1054 = vmatprep.subr.bf16.mxu0 0
    %1055 = vmatpush1.bf16.msra.mxu0 0
    %1056 = vmatprep.subr.bf16.mxu0 0
    %1057 = vmatpush1.bf16.msra.mxu0 0
    %1058 = vmatprep.subr.bf16.mxu0 0
    %1059 = vmatpush1.bf16.msra.mxu0 0
    %1060 = vmatprep.subr.bf16.mxu0 0
    %1061 = vmatpush1.bf16.msra.mxu0 0
    %1062 = vmatprep.subr.bf16.mxu0 0
    %1063 = vmatpush1.bf16.msra.mxu0 0
    %1064 = vmatprep.subr.bf16.mxu0 0
    %1065 = vmatpush1.bf16.msra.mxu0 0
    %1066 = vmatprep.subr.bf16.mxu0 0
    %1067 = vmatpush1.bf16.msra.mxu0 0
    %1068 = vmatprep.subr.bf16.mxu0 0
    %1069 = vmatpush1.bf16.msra.mxu0 0
    %1070 = vmatprep.subr.bf16.mxu0 0
    %1071 = vmatpush1.bf16.msra.mxu0 0
    %1072 = vmatprep.subr.bf16.mxu0 0
    %1073 = vmatpush1.bf16.msra.mxu0 0
    %1074 = vmatprep.subr.bf16.mxu0 0
    %1075 = vmatpush1.bf16.msra.mxu0 0
    %1076 = vmatprep.subr.bf16.mxu0 0
    %1077 = vmatpush1.bf16.msra.mxu0 0
    %1078 = vmatprep.mubr.bf16.mxu0 0
    %1079 = vmatmul.mubr.bf16.gmra.mrb[0].mxu0 %v1044
    %v1080 = vpop.f32.mrb[0].mxu0
    %v1081 = vadd.f32 %v300, %v1080
    %v1082 = vpop.f32.mrb[0].mxu0
    %v1083 = vpop.f32.mrb[0].mxu0
    %v1084 = vpop.f32.mrb[0].mxu0
    %1085 = vdwg.mxu0
    %v1086 = vxor.u32 %v1081, 2147483648
    %v1087 = vmul.f32 %v1086, 1.442695
    %v1088 = vpow.pop %v1087
    %v1089 = vadd.f32 %v1088, 1.0
    %v1090 = vrcp.pop %v1089
    %v1091 = vmul.f32 1.0, %v1090
    %v1092 = vtanh.pop %v1081
    %v1093 = vmul.f32 %v1091, %v992
    %1095 = vrot.lane.b32.xlu0 %v1092, 64
    %v1096 = vpop.permute.xlu0 %1095
    %v1098 = vmul.f32 %v1091, %v1096
    %1100 = vrot.lane.b32.xlu0 %v1098, 32
    %v1101 = vpop.permute.xlu0 %1100
    %v1103 = vadd.f32 %v1093, %v1101
    %v1104 = vtanh.pop %v1103
    %1106 = vrot.lane.b32.xlu0 %v1104, 64
    %v1107 = vpop.permute.xlu0 %1106
    %v1109 = vmul.f32 %v1091, %v1107
    %v1110 = vld [vmem:[%s4] sm:$0xff]
    %v1111 = vld [vmem:[%s4 + $0x8] sm:$0xff]
    %v1112 = vld [vmem:[%s4 + $0x10] sm:$0xff]
    %v1113 = vld [vmem:[%s4 + $0x18] sm:$0xff]
    %v1114 = vld [vmem:[%s4 + $0x20] sm:$0x1]
    %v1115 = vlaneseq
    %v1116 = vshrl.u32 %v1115, 7
    %v1117 = vsub.s32 0, %v1116
    %v1118 = vrot.slane %v1114, %v1117
    %1120 = vrot.lane.b32.xlu0 %v1109, 32
    %v1121 = vpop.permute.xlu0 %1120
    %v1122 = vsel %vm249, %v1121, 0
    %1124 = vmatprep.subr.mxu0 0.0
    %1125 = vmatpush1.msra.mxu0 %v1110
    %1126 = vmatprep.subr.mxu0 0.0
    %1127 = vmatpush1.msra.mxu0 %v1111
    %1128 = vmatprep.subr.mxu0 0.0
    %1129 = vmatpush1.msra.mxu0 %v1112
    %1130 = vmatprep.subr.mxu0 0.0
    %1131 = vmatpush1.msra.mxu0 %v1113
    %1132 = vmatprep.subr.mxu0 0.0
    %1133 = vmatpush1.msra.mxu0 0.0
    %1134 = vmatprep.subr.mxu0 0.0
    %1135 = vmatpush1.msra.mxu0 0.0
    %1136 = vmatprep.subr.mxu0 0.0
    %1137 = vmatpush1.msra.mxu0 0.0
    %1138 = vmatprep.subr.mxu0 0.0
    %1139 = vmatpush1.msra.mxu0 0.0
    %1140 = vmatprep.subr.mxu0 0.0
    %1141 = vmatpush1.msra.mxu0 0.0
    %1142 = vmatprep.subr.mxu0 0.0
    %1143 = vmatpush1.msra.mxu0 0.0
    %1144 = vmatprep.subr.mxu0 0.0
    %1145 = vmatpush1.msra.mxu0 0.0
    %1146 = vmatprep.subr.mxu0 0.0
    %1147 = vmatpush1.msra.mxu0 0.0
    %1148 = vmatprep.subr.mxu0 0.0
    %1149 = vmatpush1.msra.mxu0 0.0
    %1150 = vmatprep.subr.mxu0 0.0
    %1151 = vmatpush1.msra.mxu0 0.0
    %1152 = vmatprep.subr.mxu0 0.0
    %1153 = vmatpush1.msra.mxu0 0.0
    %1154 = vmatprep.subr.mxu0 0.0
    %1155 = vmatpush1.msra.mxu0 0.0
    %1156 = vmatprep.subr.mxu0 0.0
    %1157 = vmatpush1.msra.mxu0 0.0
    %1158 = vmatprep.subr.mxu0 0.0
    %1159 = vmatpush1.msra.mxu0 0.0
    %1160 = vmatprep.subr.mxu0 0.0
    %1161 = vmatpush1.msra.mxu0 0.0
    %1162 = vmatprep.subr.mxu0 0.0
    %1163 = vmatpush1.msra.mxu0 0.0
    %1164 = vmatprep.subr.mxu0 0.0
    %1165 = vmatpush1.msra.mxu0 0.0
    %1166 = vmatprep.subr.mxu0 0.0
    %1167 = vmatpush1.msra.mxu0 0.0
    %1168 = vmatprep.subr.mxu0 0.0
    %1169 = vmatpush1.msra.mxu0 0.0
    %1170 = vmatprep.subr.mxu0 0.0
    %1171 = vmatpush1.msra.mxu0 0.0
    %1172 = vmatprep.subr.mxu0 0.0
    %1173 = vmatpush1.msra.mxu0 0.0
    %1174 = vmatprep.subr.mxu0 0.0
    %1175 = vmatpush1.msra.mxu0 0.0
    %1176 = vmatprep.subr.mxu0 0.0
    %1177 = vmatpush1.msra.mxu0 0.0
    %1178 = vmatprep.subr.mxu0 0.0
    %1179 = vmatpush1.msra.mxu0 0.0
    %1180 = vmatprep.subr.mxu0 0.0
    %1181 = vmatpush1.msra.mxu0 0.0
    %1182 = vmatprep.subr.mxu0 0.0
    %1183 = vmatpush1.msra.mxu0 0.0
    %1184 = vmatprep.subr.mxu0 0.0
    %1185 = vmatpush1.msra.mxu0 0.0
    %1186 = vmatprep.subr.mxu0 0.0
    %1187 = vmatpush1.msra.mxu0 0.0
    %1188 = vmatprep.mubr.f32.mxu0 0.0
    %1189 = vmatmul.mubr.f32.gmra.mrb[0].mxu0 %v1122
    %v1190 = vpop.f32.mrb[0].mxu0
    %v1191 = vadd.f32 %v1118, %v1190
    %v1192 = vpop.f32.mrb[0].mxu0
    %1193 = vdwg.mxu0
    %vm1194 = vcmask 74752
    %1195 = vst.msk [vmem:[#allocation5] sm:$0x3] %vm1194, %v1191
    // Predicated region
    $region26: #{tpu_custom_call.1} parent=1 // pred_check
      _
    $region27: #{tpu_custom_call.1} parent=1 // pred_check_branch
      %1197 = sbr.rel (0) target = $region29
    $region28: #{tpu_custom_call.1} parent=1 // pred_region
      %s1199 = ssub.s32 32, 32
      %1200 = vsyncadd [#allocation4], %s1199
      %s1202 = sshll.u32 [#allocation5], 4
      %s1203 = int_to_ptr.vmem [resolvable:$true] %s1202
      %1205 = dma.vmem_to_hbm [thread:$0]  %s1203, 32, %s5, [#allocation4]
    $region29: #{tpu_custom_call.1} parent=1 // pred_fallthru
      _
    // Predicated region
    $region30: #{tpu_custom_call.1} parent=1 // pred_check
      _
    $region31: #{tpu_custom_call.1} parent=1 // pred_check_branch
      %1207 = sbr.rel (0) target = $region33
    $region32: #{tpu_custom_call.1} parent=1 // pred_region
      %1208 = dma.done [#allocation4], 32
    $region33: #{tpu_custom_call.1} parent=1 // pred_fallthru
      _
    %1209 = vsyncpa [#allocation3], 1
    %1210 = vsyncpa [#allocation4], 1

</llo_original>
